<compile_context>
chip_gen: v7x
topology: tpu7x:2x2x1
jax: 0.10.0
libtpu: 0.0.40
codegen_flags: <defaults>
</compile_context>

<pallas_src>
import numpy as np
import jax
import jax.numpy as jnp
from jax.experimental import pallas as pl
from jax.experimental.pallas import tpu as pltpu

_LANE = 128     # output last dim padded to a multiple of this (unmasked vst)
_SUBLANE = 8    # f32 sublane granularity; row tiles are multiples of this


def _round_up(x, m):
    return (x + m - 1) // m * m


def _vmem_limit_bytes(tile_n, dim_in, dim_out_p, itemsize=4):
    # double-buffered x / out tiles + (double-buffered) weight and bias copies
    need = 2 * (tile_n * dim_in + tile_n * dim_out_p) * itemsize
    need += 2 * (dim_in * dim_out_p + dim_out_p) * itemsize
    # 2x headroom for compiler temporaries (sin range reduction etc.), clamped
    # well below v7x's 64 MiB physical VMEM.
    return int(min(48 * 2**20, max(16 * 2**20, 2 * need)))


# ---------------------------------------------------------------- kernels ----

def _fourier_kernel_mxu(x_ref, wT_ref, b_ref, o_ref):
    # x_ref : (TN, dim_in)       VMEM tile
    # wT_ref: (dim_in, dim_out_p) lane-dense transposed weight (resident)
    # b_ref : (1, dim_out_p)
    # o_ref : (TN, dim_out_p)
    z = jnp.dot(x_ref[...], wT_ref[...], preferred_element_type=jnp.float32)
    # NOTE: once tiled, the VALU sin polynomial (not MXU/HBM) is the likely
    # binding slot; a bounded-range fast sin is the next lever if needed.
    o_ref[...] = jnp.sin(z + b_ref[...]).astype(o_ref.dtype)


def _fourier_kernel_vpu(x_ref, wT_ref, b_ref, o_ref):
    # Tiny dim_in (INR coordinates, K = 2..8): skip the MXU, compute z as K
    # broadcast FMAs on the VPU.
    x = x_ref[...].astype(jnp.float32)           # (TN, K)
    wt = wT_ref[...]                             # (K, dim_out_p)
    tile_n = x.shape[0]
    dim_out_p = wt.shape[1]
    # broadcast hoisted out of the K loop (JAX does not CSE broadcast_in_dim)
    z = jnp.broadcast_to(b_ref[...], (tile_n, dim_out_p)).astype(jnp.float32)
    for k in range(x.shape[1]):                  # static unroll over dim_in
        z = z + x[:, k:k + 1] * wt[k:k + 1, :]
    o_ref[...] = jnp.sin(z).astype(o_ref.dtype)


# ---------------------------------------------------------------- wrapper ----

def prepare_fourier_params(weight, bias):
    """One-time layout prep (do at init, not per forward).

    weight: (dim_out, dim_in)  ->  wT: (dim_in, dim_out_p)  (lane-dense, padded)
    bias  : (dim_out,)         ->  b2: (1, dim_out_p)
    Returns (wT, b2, dim_out).
    """
    dim_out, dim_in = weight.shape
    dim_out_p = _round_up(dim_out, _LANE)
    wT = jnp.pad(jnp.asarray(weight, jnp.float32).T,
                 ((0, 0), (0, dim_out_p - dim_out)))
    b2 = jnp.pad(jnp.asarray(bias, jnp.float32),
                 (0, dim_out_p - dim_out)).reshape(1, dim_out_p)
    return wT, b2, dim_out


def fourier_layer(x, wT, b2, dim_out, *, tile_n=512):
    """sin(x @ W^T + b). x: (N, dim_in); wT/b2/dim_out from prepare_fourier_params."""
    N, dim_in = x.shape
    dim_out_p = wT.shape[1]

    # Row tile: multiple of 8 (f32 sublane), capped so tiny N doesn't over-pad,
    # large enough that the grid has many steps for pipelining / megacore split.
    tile_n = _round_up(max(_SUBLANE, min(tile_n, _round_up(N, _SUBLANE))), _SUBLANE)
    N_p = _round_up(N, tile_n)
    if N_p != N:
        x = jnp.pad(x, ((0, N_p - N), (0, 0)))   # tail tile padded, sliced off below

    grid = (N_p // tile_n,)
    kernel = _fourier_kernel_vpu if dim_in <= 8 else _fourier_kernel_mxu

    out = pl.pallas_call(
        kernel,
        out_shape=jax.ShapeDtypeStruct((N_p, dim_out_p), x.dtype),
        grid_spec=pltpu.PrefetchScalarGridSpec(
            num_scalar_prefetch=0,
            grid=grid,
            in_specs=[
                pl.BlockSpec((tile_n, dim_in), lambda i: (i, 0)),
                # Constant index_map -> weight/bias DMA'd once and reused.
                # TODO(synk): pin to a single VMEM buffer (pl.Buffered(1)) to
                # reclaim one extra copy of VMEM headroom on v7x.
                pl.BlockSpec((dim_in, dim_out_p), lambda i: (0, 0)),
                pl.BlockSpec((1, dim_out_p), lambda i: (0, 0)),
            ],
            out_specs=pl.BlockSpec((tile_n, dim_out_p), lambda i: (i, 0)),
        ),
        compiler_params=pltpu.CompilerParams(
            # row-tile axis is embarrassingly parallel -> v7x 2-TC sharding
            dimension_semantics=("parallel",),
            vmem_limit_bytes=_vmem_limit_bytes(tile_n, dim_in, dim_out_p),
        ),
    )(x, wT, b2)

    return out[:N, :dim_out]


def init_fourier_layer_params(key, dim_in, dim_out, weight_scale):
    """Deterministic re-implementation of the PyTorch __init__."""
    kw, kb = jax.random.split(key)
    # nn.Linear default init: U(-1/sqrt(dim_in), 1/sqrt(dim_in)), then *= weight_scale
    bound = 1.0 / np.sqrt(dim_in)
    weight = jax.random.uniform(
        kw, (dim_out, dim_in), jnp.float32, minval=-bound, maxval=bound
    ) * weight_scale
    # bias.uniform_(-pi, pi)
    bias = jax.random.uniform(
        kb, (dim_out,), jnp.float32, minval=-np.pi, maxval=np.pi
    )
    return weight, bias


if __name__ == "__main__":
    key = jax.random.PRNGKey(0)
    k1, k2, k3, k4 = jax.random.split(key, 4)

    # Case 1: INR-style coordinate input (tiny dim_in -> VPU path),
    # ragged N and dim_out not a multiple of 128 (exercises pad + tail slice).
    N1, di1, do1 = 300, 3, 96
    x1 = jax.random.normal(k1, (N1, di1), jnp.float32)
    w1, b1 = init_fourier_layer_params(k2, di1, do1, weight_scale=30.0)
    wT1, bb1, _ = prepare_fourier_params(w1, b1)
    out1 = jax.block_until_ready(fourier_layer(x1, wT1, bb1, do1, tile_n=128))
    ref1 = jnp.sin(x1 @ w1.T + b1)
    np.testing.assert_allclose(np.asarray(out1), np.asarray(ref1),
                               atol=1e-4, rtol=1e-4)

    # Case 2: wider feature input (MXU path), aligned shapes.
    N2, di2, do2 = 512, 32, 256
    x2 = jax.random.normal(k3, (N2, di2), jnp.float32)
    w2, b2v = init_fourier_layer_params(k4, di2, do2, weight_scale=30.0)
    wT2, bb2, _ = prepare_fourier_params(w2, b2v)
    out2 = jax.block_until_ready(fourier_layer(x2, wT2, bb2, do2, tile_n=128))
    ref2 = jnp.sin(x2 @ w2.T + b2v)
    np.testing.assert_allclose(np.asarray(out2), np.asarray(ref2),
                               atol=1e-4, rtol=1e-4)

    print("KERNEL_OK")
</pallas_src>

<mosaic_0001>
module attributes {stable_mosaic.version = 11 : i64} {
  func.func @_fourier_kernel_vpu(%arg0: i32, %arg1: memref<128x3xf32, #tpu.memory_space<vmem>>, %arg2: memref<3x128xf32, #tpu.memory_space<vmem>>, %arg3: memref<1x128xf32, #tpu.memory_space<vmem>>, %arg4: memref<128x128xf32, #tpu.memory_space<vmem>>) attributes {dimension_semantics = [#tpu.dimension_semantics<parallel>], iteration_bounds = array<i64: 3>, scalar_prefetch = 0 : i64, scratch_operands = 0 : i64, tpu.core_type = #tpu.core_type<tc>, window_params = [{transform_indices = @transform_0, window_bounds = array<i64: 128, 3>}, {pipeline_mode = #tpu.pipeline_mode<synchronous>, transform_indices = @transform_1, window_bounds = array<i64: 3, 128>}, {pipeline_mode = #tpu.pipeline_mode<synchronous>, transform_indices = @transform_2, window_bounds = array<i64: 1, 128>}, {transform_indices = @transform_3, window_bounds = array<i64: 128, 128>}]} {
    %c0 = arith.constant 0 : index
    %c0_0 = arith.constant 0 : index
    %0 = vector.load %arg1[%c0, %c0_0] : memref<128x3xf32, #tpu.memory_space<vmem>>, vector<128x3xf32>
    %c0_1 = arith.constant 0 : index
    %c0_2 = arith.constant 0 : index
    %1 = vector.load %arg2[%c0_1, %c0_2] : memref<3x128xf32, #tpu.memory_space<vmem>>, vector<3x128xf32>
    %c0_3 = arith.constant 0 : index
    %c0_4 = arith.constant 0 : index
    %2 = vector.load %arg3[%c0_3, %c0_4] : memref<1x128xf32, #tpu.memory_space<vmem>>, vector<1x128xf32>
    %3 = vector.shape_cast %2 : vector<1x128xf32> to vector<1x128xf32>
    %4 = vector.broadcast %3 : vector<1x128xf32> to vector<128x128xf32>
    %5 = vector.extract_strided_slice %0 {offsets = [0, 0], sizes = [128, 1], strides = [1, 1]} : vector<128x3xf32> to vector<128x1xf32>
    %6 = vector.extract_strided_slice %1 {offsets = [0, 0], sizes = [1, 128], strides = [1, 1]} : vector<3x128xf32> to vector<1x128xf32>
    %7 = vector.broadcast %5 : vector<128x1xf32> to vector<128x128xf32>
    %8 = vector.broadcast %6 : vector<1x128xf32> to vector<128x128xf32>
    %9 = arith.mulf %7, %8 : vector<128x128xf32>
    %10 = arith.addf %4, %9 : vector<128x128xf32>
    %11 = vector.extract_strided_slice %0 {offsets = [0, 1], sizes = [128, 1], strides = [1, 1]} : vector<128x3xf32> to vector<128x1xf32>
    %12 = vector.extract_strided_slice %1 {offsets = [1, 0], sizes = [1, 128], strides = [1, 1]} : vector<3x128xf32> to vector<1x128xf32>
    %13 = vector.broadcast %11 : vector<128x1xf32> to vector<128x128xf32>
    %14 = vector.broadcast %12 : vector<1x128xf32> to vector<128x128xf32>
    %15 = arith.mulf %13, %14 : vector<128x128xf32>
    %16 = arith.addf %10, %15 : vector<128x128xf32>
    %17 = vector.extract_strided_slice %0 {offsets = [0, 2], sizes = [128, 1], strides = [1, 1]} : vector<128x3xf32> to vector<128x1xf32>
    %18 = vector.extract_strided_slice %1 {offsets = [2, 0], sizes = [1, 128], strides = [1, 1]} : vector<3x128xf32> to vector<1x128xf32>
    %19 = vector.broadcast %17 : vector<128x1xf32> to vector<128x128xf32>
    %20 = vector.broadcast %18 : vector<1x128xf32> to vector<128x128xf32>
    %21 = arith.mulf %19, %20 : vector<128x128xf32>
    %22 = arith.addf %16, %21 : vector<128x128xf32>
    %23 = math.sin %22 : vector<128x128xf32>
    %c0_5 = arith.constant 0 : index
    %c0_6 = arith.constant 0 : index
    %24 = vector.load %arg4[%c0_5, %c0_6] : memref<128x128xf32, #tpu.memory_space<vmem>>, vector<128x128xf32>
    tpu.vector_store %arg4[%c0_5, %c0_6], %23 {strides = array<i32>} : memref<128x128xf32, #tpu.memory_space<vmem>>, vector<128x128xf32>,
    return
  }
  func.func @transform_0(%arg0: i32) -> (i32, i32) {
    %c0_i32 = arith.constant 0 : i32
    %c0_i32_0 = arith.constant 0 : i32
    return %arg0, %c0_i32 : i32, i32
  }
  func.func @transform_1(%arg0: i32) -> (i32, i32) {
    %c0_i32 = arith.constant 0 : i32
    %c0_i32_0 = arith.constant 0 : i32
    %c0_i32_1 = arith.constant 0 : i32
    return %c0_i32, %c0_i32_0 : i32, i32
  }
  func.func @transform_2(%arg0: i32) -> (i32, i32) {
    %c0_i32 = arith.constant 0 : i32
    %c0_i32_0 = arith.constant 0 : i32
    %c0_i32_1 = arith.constant 0 : i32
    return %c0_i32, %c0_i32_0 : i32, i32
  }
  func.func @transform_3(%arg0: i32) -> (i32, i32) {
    %c0_i32 = arith.constant 0 : i32
    %c0_i32_0 = arith.constant 0 : i32
    return %arg0, %c0_i32 : i32, i32
  }
}

</mosaic_0001>

<llo_original>
// kernel: tpu_custom_call.1
$region0: #{tpu_custom_call.1}
  #allocation0 [shape = 'u32[]', space=smem, size = 0x4, offset = 0x4, fixed_abs, tag = 'smem constant byte address 0x4 - core index']
  #allocation1 [shape = 'u32[144,128]{1,0:T(1,128)}', space=vmem, size = 0x12000, scoped, tag = 'internal scratch']
  %s0 = inlined_call_operand.vmem [shape: f32[384,3], index: 0, kind: input, shape index: {}]
  %s1 = inlined_call_operand.vmem [shape: f32[3,128], index: 1, kind: input, shape index: {}]
  %s2 = inlined_call_operand.vmem [shape: f32[1,128], index: 2, kind: input, shape index: {}]
  %s3 = inlined_call_operand.hbm [shape: f32[384,128], index: 3, kind: output, shape index: {}]
  %s4 = sld [smem:[#allocation0]]
  $region45: #{tpu_custom_call.1} parent=0
    _
  %s6 = ssub.s32 1, %s4
  %s7 = scalar_select 0, %s6, %s4
  $region1: #{tpu_custom_call.1} parent=0
    #allocation2 [shape = 'u8[131072]{0}', space=vmem, size = 0x20000, scoped, tag = 'output window, operand 0']
    #allocation3 [shape = 's32[2]{0}', space=sflag, size = 0x8, scoped, tag = 'scoped memory for tpu_custom_call.1']
    %8 = vsyncpa [#allocation3], 0
    %s9 = scalar_lea.sflag [#allocation3], 1
    %10 = vsyncpa %s9, 0
    loop: start=0, step=1, limit=5
    $region2: #{tpu_custom_call.1} parent=1 // loop_pre_header
      _
    $region3: #{tpu_custom_call.1} parent=1 // loop_header
      %s12 = sphi 0, %s16
      %p13 = scmp.ge.s32.totalorder %s12, 5
      %s22 = sphi 0, %s24
      %s25 = sphi 0, %s22
      %s26 = sphi 0, %s25
      %s42 = sphi 0, %s26
      %s46 = sphi 0, %s46
      %s48 = sphi 0, %s46
      %s49 = sphi 0, %s48
      %s63 = sphi 0, %s49
      %s67 = sphi 0, %s67
      %s69 = sphi 0, %s67
      %s70 = sphi 0, %s69
      %s84 = sphi 0, %s70
      %s90 = sphi 0, %s92
      %s93 = sphi 0, %s90
      %s94 = sphi 0, %s93
      %s110 = sphi 0, %s94
    $region4: #{tpu_custom_call.1} parent=1 // loop_header_branch
      %15 = sbr.rel (%p13) target = $region8
    $region5: #{tpu_custom_call.1} parent=1 // loop_body
      %s17 = ssub.s32 %s12, 1
      %s18 = ssub.s32 %s12, 2
      %s19 = sadd.s32 %s12, 1
      %s20 = ssub.s32 %s12, %s19
      %p21 = scmp.eq.s32.totalorder %s20, 0
      %s23 = sadd.s32 %s22, 1
      %s24 = scalar_select %p21, %s22, %s23
      %p27 = pneg %p21
      %p28 = scmp.eq.s32.totalorder %s12, 2
      %p29 = por %p27, %p28
      %p30 = scmp.ne.s32.totalorder %s22, %s25
      %p31 = scmp.eq.s32.totalorder %s12, 0
      %p32 = por %p30, %p31
      %p33 = scmp.ne.s32.totalorder %s22, %s25
      %p34 = scmp.eq.s32.totalorder %s17, 2
      %p35 = por %p33, %p34
      %p36 = scmp.ne.s32.totalorder %s25, %s26
      %p37 = scmp.eq.s32.totalorder %s17, 0
      %p38 = por %p36, %p37
      %p39 = scmp.ne.s32.totalorder %s25, %s26
      %p40 = scmp.eq.s32.totalorder %s18, 2
      %p41 = por %p39, %p40
      %p43 = scmp.ne.s32.totalorder %s26, %s42
      %p44 = scmp.eq.s32.totalorder %s18, 0
      %p45 = por %p43, %p44
      %s47 = sadd.s32 %s46, 1
      %p50 = scmp.eq.s32.totalorder %s12, 2
      %p51 = scmp.ne.s32.totalorder %s46, %s48
      %p52 = scmp.eq.s32.totalorder %s12, 0
      %p53 = por %p51, %p52
      %p54 = scmp.ne.s32.totalorder %s46, %s48
      %p55 = scmp.eq.s32.totalorder %s17, 2
      %p56 = por %p54, %p55
      %p57 = scmp.ne.s32.totalorder %s48, %s49
      %p58 = scmp.eq.s32.totalorder %s17, 0
      %p59 = por %p57, %p58
      %p60 = scmp.ne.s32.totalorder %s48, %s49
      %p61 = scmp.eq.s32.totalorder %s18, 2
      %p62 = por %p60, %p61
      %p64 = scmp.ne.s32.totalorder %s49, %s63
      %p65 = scmp.eq.s32.totalorder %s18, 0
      %p66 = por %p64, %p65
      %s68 = sadd.s32 %s67, 1
      %p71 = scmp.eq.s32.totalorder %s12, 2
      %p72 = scmp.ne.s32.totalorder %s67, %s69
      %p73 = scmp.eq.s32.totalorder %s12, 0
      %p74 = por %p72, %p73
      %p75 = scmp.ne.s32.totalorder %s67, %s69
      %p76 = scmp.eq.s32.totalorder %s17, 2
      %p77 = por %p75, %p76
      %p78 = scmp.ne.s32.totalorder %s69, %s70
      %p79 = scmp.eq.s32.totalorder %s17, 0
      %p80 = por %p78, %p79
      %p81 = scmp.ne.s32.totalorder %s69, %s70
      %p82 = scmp.eq.s32.totalorder %s18, 2
      %p83 = por %p81, %p82
      %p85 = scmp.ne.s32.totalorder %s70, %s84
      %p86 = scmp.eq.s32.totalorder %s18, 0
      %p87 = por %p85, %p86
      %s88 = ssub.s32 %s12, %s19
      %p89 = scmp.eq.s32.totalorder %s88, 0
      %s91 = sadd.s32 %s90, 1
      %s92 = scalar_select %p89, %s90, %s91
      %p95 = pneg %p89
      %p96 = scmp.eq.s32.totalorder %s12, 2
      %p97 = por %p95, %p96
      %p98 = scmp.ne.s32.totalorder %s90, %s93
      %p99 = scmp.eq.s32.totalorder %s12, 0
      %p100 = por %p98, %p99
      %p101 = scmp.ne.s32.totalorder %s90, %s93
      %p102 = scmp.eq.s32.totalorder %s17, 2
      %p103 = por %p101, %p102
      %p104 = scmp.ne.s32.totalorder %s93, %s94
      %p105 = scmp.eq.s32.totalorder %s17, 0
      %p106 = por %p104, %p105
      %p107 = scmp.ne.s32.totalorder %s93, %s94
      %p108 = scmp.eq.s32.totalorder %s18, 2
      %p109 = por %p107, %p108
      %p111 = scmp.ne.s32.totalorder %s94, %s110
      %p112 = scmp.eq.s32.totalorder %s18, 0
      %p113 = por %p111, %p112
      %p114 = scmp.le.s32.totalorder 1, %s12
      %p115 = scmp.lt.s32.totalorder %s12, 4
      %p116 = pnand %p114, %p115
      %p117 = pneg %p116
      // Predicated region
      $region9: #{tpu_custom_call.1} parent=5 // pred_check
        _
      $region10: #{tpu_custom_call.1} parent=5 // pred_check_branch
        %119 = sbr.rel (%p116) target = $region12
      $region11: #{tpu_custom_call.1} parent=5 // pred_region
        %s120 = ssub.s32 %s12, 1
        // Predicated region
        $region13: #{tpu_custom_call.1} parent=11 // pred_check
          %p121 = pneg %p59
        $region14: #{tpu_custom_call.1} parent=11 // pred_check_branch
          %123 = sbr.rel (%p121) target = $region16
        $region15: #{tpu_custom_call.1} parent=11 // pred_region
          _
        $region16: #{tpu_custom_call.1} parent=11 // pred_fallthru
          _
        // Predicated region
        $region17: #{tpu_custom_call.1} parent=11 // pred_check
          %p124 = pneg %p80
        $region18: #{tpu_custom_call.1} parent=11 // pred_check_branch
          %126 = sbr.rel (%p124) target = $region20
        $region19: #{tpu_custom_call.1} parent=11 // pred_region
          _
        $region20: #{tpu_custom_call.1} parent=11 // pred_fallthru
          _
      $region12: #{tpu_custom_call.1} parent=5 // pred_fallthru
        _
      %p127 = scmp.lt.s32.totalorder %s12, 3
      // Predicated region
      $region21: #{tpu_custom_call.1} parent=5 // pred_check
        %p128 = pneg %p127
      $region22: #{tpu_custom_call.1} parent=5 // pred_check_branch
        %130 = sbr.rel (%p128) target = $region24
      $region23: #{tpu_custom_call.1} parent=5 // pred_region
        // Predicated region
        $region25: #{tpu_custom_call.1} parent=23 // pred_check
          %p131 = pneg %p32
        $region26: #{tpu_custom_call.1} parent=23 // pred_check_branch
          %133 = sbr.rel (%p131) target = $region28
        $region27: #{tpu_custom_call.1} parent=23 // pred_region
          %s134 = smul.u32 16, %s12
          %p135 = scmp.lt.s32.totalorder %s134, 47
          %s136 = scalar_select %p135, %s134, 47
          %s137 = smul.addr %s136, 8
          %s138 = scalar_lea.vmem %s0, %s137
          %s139 = smul.u32 16, %s12
        $region28: #{tpu_custom_call.1} parent=23 // pred_fallthru
          _
      $region24: #{tpu_custom_call.1} parent=5 // pred_fallthru
        _
      %p140 = scmp.le.s32.totalorder 1, %s12
      %p141 = scmp.lt.s32.totalorder %s12, 4
      %p142 = pnand %p140, %p141
      %p143 = pneg %p142
      // Predicated region
      $region29: #{tpu_custom_call.1} parent=5 // pred_check
        _
      $region30: #{tpu_custom_call.1} parent=5 // pred_check_branch
        %145 = sbr.rel (%p142) target = $region32
      $region31: #{tpu_custom_call.1} parent=5 // pred_region
        %s146 = ssub.s32 %s12, 1
        %s147 = smul.u32 16, %s17
        %p148 = scmp.lt.s32.totalorder %s147, 47
        %s149 = scalar_select %p148, %s147, 47
        %s150 = smul.addr %s149, 8
        %s151 = scalar_lea.vmem %s0, %s150
        %p152 = pneg %p38
        %p153 = pneg %p35
        %p154 = pneg %p59
        %p155 = pneg %p56
        %p156 = pneg %p80
        %p157 = pneg %p77
        %p158 = pneg %p106
        %p159 = pneg %p103
        %s160 = sand.u32 %s93, 1
        %s161 = scalar_lea.sflag [#allocation3], %s160
        %s162 = sand.u32 %s93, 1
        %s163 = smul.addr %s162, 128
        %s164 = scalar_lea.vmem [#allocation2], %s163
        %s165 = smul.u32 16, %s17
        %p166 = scmp.lt.s32.totalorder %s165, 47
        %s167 = scalar_select %p166, %s165, 47
        %s168 = smul.addr %s167, 8
        %s169 = scalar_lea.vmem %s0, %s168
        %s170 = smul.u32 16, %s17
        %s171 = smul.u32 16, %s17
        %v172 = vld [vmem:[%s169] sm:$0xff]
        %v173 = vld [vmem:[%s169 + $0x8] sm:$0xff]
        %v174 = vld [vmem:[%s169 + $0x10] sm:$0xff]
        %v175 = vld [vmem:[%s169 + $0x18] sm:$0xff]
        %v176 = vld [vmem:[%s169 + $0x20] sm:$0xff]
        %v177 = vld [vmem:[%s169 + $0x28] sm:$0xff]
        %v178 = vld [vmem:[%s169 + $0x30] sm:$0xff]
        %v179 = vld [vmem:[%s169 + $0x38] sm:$0xff]
        %v180 = vld [vmem:[%s169 + $0x40] sm:$0xff]
        %v181 = vld [vmem:[%s169 + $0x48] sm:$0xff]
        %v182 = vld [vmem:[%s169 + $0x50] sm:$0xff]
        %v183 = vld [vmem:[%s169 + $0x58] sm:$0xff]
        %v184 = vld [vmem:[%s169 + $0x60] sm:$0xff]
        %v185 = vld [vmem:[%s169 + $0x68] sm:$0xff]
        %v186 = vld [vmem:[%s169 + $0x70] sm:$0xff]
        %v187 = vld [vmem:[%s169 + $0x78] sm:$0xff]
        %v188 = vld [vmem:[%s1] sm:$0x7]
        %v189 = vld [vmem:[%s2] sm:$0x1]
        %v191 = vlaneseq
        %v192 = vshrl.u32 %v191, 7
        %v193 = vsub.s32 0, %v192
        %v194 = vrot.slane %v189, %v193
        %197 = vset.pattern.permute.xlu0 0
        %198 = vperm.xlu0 %197, %v172
        %v199 = vpop.permute.xlu0 %198
        %202 = vset.pattern.permute.xlu0 0
        %203 = vperm.xlu0 %202, %v173
        %v204 = vpop.permute.xlu0 %203
        %207 = vset.pattern.permute.xlu0 0
        %208 = vperm.xlu0 %207, %v174
        %v209 = vpop.permute.xlu0 %208
        %212 = vset.pattern.permute.xlu0 0
        %213 = vperm.xlu0 %212, %v175
        %v214 = vpop.permute.xlu0 %213
        %217 = vset.pattern.permute.xlu0 0
        %218 = vperm.xlu0 %217, %v176
        %v219 = vpop.permute.xlu0 %218
        %222 = vset.pattern.permute.xlu0 0
        %223 = vperm.xlu0 %222, %v177
        %v224 = vpop.permute.xlu0 %223
        %227 = vset.pattern.permute.xlu0 0
        %228 = vperm.xlu0 %227, %v178
        %v229 = vpop.permute.xlu0 %228
        %232 = vset.pattern.permute.xlu0 0
        %233 = vperm.xlu0 %232, %v179
        %v234 = vpop.permute.xlu0 %233
        %237 = vset.pattern.permute.xlu0 0
        %238 = vperm.xlu0 %237, %v180
        %v239 = vpop.permute.xlu0 %238
        %242 = vset.pattern.permute.xlu0 0
        %243 = vperm.xlu0 %242, %v181
        %v244 = vpop.permute.xlu0 %243
        %247 = vset.pattern.permute.xlu0 0
        %248 = vperm.xlu0 %247, %v182
        %v249 = vpop.permute.xlu0 %248
        %252 = vset.pattern.permute.xlu0 0
        %253 = vperm.xlu0 %252, %v183
        %v254 = vpop.permute.xlu0 %253
        %257 = vset.pattern.permute.xlu0 0
        %258 = vperm.xlu0 %257, %v184
        %v259 = vpop.permute.xlu0 %258
        %262 = vset.pattern.permute.xlu0 0
        %263 = vperm.xlu0 %262, %v185
        %v264 = vpop.permute.xlu0 %263
        %267 = vset.pattern.permute.xlu0 0
        %268 = vperm.xlu0 %267, %v186
        %v269 = vpop.permute.xlu0 %268
        %272 = vset.pattern.permute.xlu0 0
        %273 = vperm.xlu0 %272, %v187
        %v274 = vpop.permute.xlu0 %273
        %v276 = vlaneseq
        %v277 = vshrl.u32 %v276, 7
        %v278 = vsub.s32 0, %v277
        %v279 = vrot.slane %v188, %v278
        %v280 = vmul.f32 %v199, %v279
        %v281 = vmul.f32 %v204, %v279
        %v282 = vmul.f32 %v209, %v279
        %v283 = vmul.f32 %v214, %v279
        %v284 = vmul.f32 %v219, %v279
        %v285 = vmul.f32 %v224, %v279
        %v286 = vmul.f32 %v229, %v279
        %v287 = vmul.f32 %v234, %v279
        %v288 = vmul.f32 %v239, %v279
        %v289 = vmul.f32 %v244, %v279
        %v290 = vmul.f32 %v249, %v279
        %v291 = vmul.f32 %v254, %v279
        %v292 = vmul.f32 %v259, %v279
        %v293 = vmul.f32 %v264, %v279
        %v294 = vmul.f32 %v269, %v279
        %v295 = vmul.f32 %v274, %v279
        %v296 = vadd.f32 %v194, %v280
        %v297 = vadd.f32 %v194, %v281
        %v298 = vadd.f32 %v194, %v282
        %v299 = vadd.f32 %v194, %v283
        %v300 = vadd.f32 %v194, %v284
        %v301 = vadd.f32 %v194, %v285
        %v302 = vadd.f32 %v194, %v286
        %v303 = vadd.f32 %v194, %v287
        %v304 = vadd.f32 %v194, %v288
        %v305 = vadd.f32 %v194, %v289
        %v306 = vadd.f32 %v194, %v290
        %v307 = vadd.f32 %v194, %v291
        %v308 = vadd.f32 %v194, %v292
        %v309 = vadd.f32 %v194, %v293
        %v310 = vadd.f32 %v194, %v294
        %v311 = vadd.f32 %v194, %v295
        %312 = vset.pattern.permute.xlu0 1
        %313 = vperm.xlu0 %312, %v172
        %v314 = vpop.permute.xlu0 %313
        %316 = vset.pattern.permute.xlu0 1
        %317 = vperm.xlu0 %316, %v173
        %v318 = vpop.permute.xlu0 %317
        %320 = vset.pattern.permute.xlu0 1
        %321 = vperm.xlu0 %320, %v174
        %v322 = vpop.permute.xlu0 %321
        %324 = vset.pattern.permute.xlu0 1
        %325 = vperm.xlu0 %324, %v175
        %v326 = vpop.permute.xlu0 %325
        %328 = vset.pattern.permute.xlu0 1
        %329 = vperm.xlu0 %328, %v176
        %v330 = vpop.permute.xlu0 %329
        %332 = vset.pattern.permute.xlu0 1
        %333 = vperm.xlu0 %332, %v177
        %v334 = vpop.permute.xlu0 %333
        %336 = vset.pattern.permute.xlu0 1
        %337 = vperm.xlu0 %336, %v178
        %v338 = vpop.permute.xlu0 %337
        %340 = vset.pattern.permute.xlu0 1
        %341 = vperm.xlu0 %340, %v179
        %v342 = vpop.permute.xlu0 %341
        %344 = vset.pattern.permute.xlu0 1
        %345 = vperm.xlu0 %344, %v180
        %v346 = vpop.permute.xlu0 %345
        %348 = vset.pattern.permute.xlu0 1
        %349 = vperm.xlu0 %348, %v181
        %v350 = vpop.permute.xlu0 %349
        %352 = vset.pattern.permute.xlu0 1
        %353 = vperm.xlu0 %352, %v182
        %v354 = vpop.permute.xlu0 %353
        %356 = vset.pattern.permute.xlu0 1
        %357 = vperm.xlu0 %356, %v183
        %v358 = vpop.permute.xlu0 %357
        %360 = vset.pattern.permute.xlu0 1
        %361 = vperm.xlu0 %360, %v184
        %v362 = vpop.permute.xlu0 %361
        %364 = vset.pattern.permute.xlu0 1
        %365 = vperm.xlu0 %364, %v185
        %v366 = vpop.permute.xlu0 %365
        %368 = vset.pattern.permute.xlu0 1
        %369 = vperm.xlu0 %368, %v186
        %v370 = vpop.permute.xlu0 %369
        %372 = vset.pattern.permute.xlu0 1
        %373 = vperm.xlu0 %372, %v187
        %v374 = vpop.permute.xlu0 %373
        %v376 = vlaneseq
        %v377 = vshrl.u32 %v376, 7
        %v378 = vsub.s32 1, %v377
        %v379 = vrot.slane %v188, %v378
        %v380 = vmul.f32 %v314, %v379
        %v381 = vmul.f32 %v318, %v379
        %v382 = vmul.f32 %v322, %v379
        %v383 = vmul.f32 %v326, %v379
        %v384 = vmul.f32 %v330, %v379
        %v385 = vmul.f32 %v334, %v379
        %v386 = vmul.f32 %v338, %v379
        %v387 = vmul.f32 %v342, %v379
        %v388 = vmul.f32 %v346, %v379
        %v389 = vmul.f32 %v350, %v379
        %v390 = vmul.f32 %v354, %v379
        %v391 = vmul.f32 %v358, %v379
        %v392 = vmul.f32 %v362, %v379
        %v393 = vmul.f32 %v366, %v379
        %v394 = vmul.f32 %v370, %v379
        %v395 = vmul.f32 %v374, %v379
        %v396 = vadd.f32 %v296, %v380
        %v397 = vadd.f32 %v297, %v381
        %v398 = vadd.f32 %v298, %v382
        %v399 = vadd.f32 %v299, %v383
        %v400 = vadd.f32 %v300, %v384
        %v401 = vadd.f32 %v301, %v385
        %v402 = vadd.f32 %v302, %v386
        %v403 = vadd.f32 %v303, %v387
        %v404 = vadd.f32 %v304, %v388
        %v405 = vadd.f32 %v305, %v389
        %v406 = vadd.f32 %v306, %v390
        %v407 = vadd.f32 %v307, %v391
        %v408 = vadd.f32 %v308, %v392
        %v409 = vadd.f32 %v309, %v393
        %v410 = vadd.f32 %v310, %v394
        %v411 = vadd.f32 %v311, %v395
        %412 = vset.pattern.permute.xlu0 2
        %413 = vperm.xlu0 %412, %v172
        %v414 = vpop.permute.xlu0 %413
        %416 = vset.pattern.permute.xlu0 2
        %417 = vperm.xlu0 %416, %v173
        %v418 = vpop.permute.xlu0 %417
        %420 = vset.pattern.permute.xlu0 2
        %421 = vperm.xlu0 %420, %v174
        %v422 = vpop.permute.xlu0 %421
        %424 = vset.pattern.permute.xlu0 2
        %425 = vperm.xlu0 %424, %v175
        %v426 = vpop.permute.xlu0 %425
        %428 = vset.pattern.permute.xlu0 2
        %429 = vperm.xlu0 %428, %v176
        %v430 = vpop.permute.xlu0 %429
        %432 = vset.pattern.permute.xlu0 2
        %433 = vperm.xlu0 %432, %v177
        %v434 = vpop.permute.xlu0 %433
        %436 = vset.pattern.permute.xlu0 2
        %437 = vperm.xlu0 %436, %v178
        %v438 = vpop.permute.xlu0 %437
        %440 = vset.pattern.permute.xlu0 2
        %441 = vperm.xlu0 %440, %v179
        %v442 = vpop.permute.xlu0 %441
        %444 = vset.pattern.permute.xlu0 2
        %445 = vperm.xlu0 %444, %v180
        %v446 = vpop.permute.xlu0 %445
        %448 = vset.pattern.permute.xlu0 2
        %449 = vperm.xlu0 %448, %v181
        %v450 = vpop.permute.xlu0 %449
        %452 = vset.pattern.permute.xlu0 2
        %453 = vperm.xlu0 %452, %v182
        %v454 = vpop.permute.xlu0 %453
        %456 = vset.pattern.permute.xlu0 2
        %457 = vperm.xlu0 %456, %v183
        %v458 = vpop.permute.xlu0 %457
        %460 = vset.pattern.permute.xlu0 2
        %461 = vperm.xlu0 %460, %v184
        %v462 = vpop.permute.xlu0 %461
        %464 = vset.pattern.permute.xlu0 2
        %465 = vperm.xlu0 %464, %v185
        %v466 = vpop.permute.xlu0 %465
        %468 = vset.pattern.permute.xlu0 2
        %469 = vperm.xlu0 %468, %v186
        %v470 = vpop.permute.xlu0 %469
        %472 = vset.pattern.permute.xlu0 2
        %473 = vperm.xlu0 %472, %v187
        %v474 = vpop.permute.xlu0 %473
        %v476 = vlaneseq
        %v477 = vshrl.u32 %v476, 7
        %v478 = vsub.s32 2, %v477
        %v479 = vrot.slane %v188, %v478
        %v480 = vmul.f32 %v414, %v479
        %v481 = vmul.f32 %v418, %v479
        %v482 = vmul.f32 %v422, %v479
        %v483 = vmul.f32 %v426, %v479
        %v484 = vmul.f32 %v430, %v479
        %v485 = vmul.f32 %v434, %v479
        %v486 = vmul.f32 %v438, %v479
        %v487 = vmul.f32 %v442, %v479
        %v488 = vmul.f32 %v446, %v479
        %v489 = vmul.f32 %v450, %v479
        %v490 = vmul.f32 %v454, %v479
        %v491 = vmul.f32 %v458, %v479
        %v492 = vmul.f32 %v462, %v479
        %v493 = vmul.f32 %v466, %v479
        %v494 = vmul.f32 %v470, %v479
        %v495 = vmul.f32 %v474, %v479
        %v496 = vadd.f32 %v396, %v480
        %v497 = vadd.f32 %v397, %v481
        %v498 = vadd.f32 %v398, %v482
        %v499 = vadd.f32 %v399, %v483
        %v500 = vadd.f32 %v400, %v484
        %v501 = vadd.f32 %v401, %v485
        %v502 = vadd.f32 %v402, %v486
        %v503 = vadd.f32 %v403, %v487
        %v504 = vadd.f32 %v404, %v488
        %v505 = vadd.f32 %v405, %v489
        %v506 = vadd.f32 %v406, %v490
        %v507 = vadd.f32 %v407, %v491
        %v508 = vadd.f32 %v408, %v492
        %v509 = vadd.f32 %v409, %v493
        %v510 = vadd.f32 %v410, %v494
        %v511 = vadd.f32 %v411, %v495
        %v512 = vand.u32 2147483647, %v496
        %vm513 = vcmp.le.f32.partialorder %v512, 0.7853982
        %vm514 = vcmp.lt.s32.totalorder %v496, 0
        %v515 = vand.u32 %v496, 2139095040
        %v516 = vshrl.u32 %v515, 23
        %v517 = vsub.s32 %v516, 127
        %v518 = vand.u32 2147483647, %v496
        %v519 = vand.u32 %v518, 8388607
        %v520 = vor.u32 %v519, 8388608
        %v521 = vsub.s32 0, %v520
        %v522 = vadd.s32 %v517, 1
        %vm523 = vcmp.gt.s32.totalorder %v522, 0
        %v524 = vsel %vm523, %v522, 0
        %v525 = vshrl.u32 %v524, 5
        %v526 = vand.u32 %v524, 31
        %v527 = vsub.s32 32, %v526
        %v528 = vshrl.u32 683565275, %v527
        %v529 = vshll.u32 683565275, %v526
        %v530 = vshrl.u32 2475754826, %v527
        %v531 = vor.u32 %v529, %v530
        %v532 = vshll.u32 2475754826, %v526
        %v533 = vshrl.u32 2131351028, %v527
        %v534 = vor.u32 %v532, %v533
        %v535 = vshll.u32 2131351028, %v526
        %v536 = vshrl.u32 2102212464, %v527
        %v537 = vor.u32 %v535, %v536
        %v538 = vshll.u32 2102212464, %v526
        %v539 = vshrl.u32 920167782, %v527
        %v540 = vor.u32 %v538, %v539
        %v541 = vshll.u32 920167782, %v526
        %v542 = vshrl.u32 1326507024, %v527
        %v543 = vor.u32 %v541, %v542
        %vm544 = vcmp.lt.s32.totalorder %v525, 1
        %vm545 = vcmp.lt.s32.totalorder %v525, 2
        %vm546 = vcmp.lt.s32.totalorder %v525, 3
        %vm547 = vcmp.lt.s32.totalorder %v525, 4
        %v548 = vsel %vm544, %v528, %v531
        %v549 = vsel %vm547, %v537, 2102212464
        %v550 = vsel %vm546, %v534, %v549
        %v551 = vsel %vm545, %v548, %v550
        %v552 = vsel %vm544, %v531, %v534
        %v553 = vsel %vm547, %v540, 920167782
        %v554 = vsel %vm546, %v537, %v553
        %v555 = vsel %vm545, %v552, %v554
        %v556 = vsel %vm544, %v534, %v537
        %v557 = vsel %vm547, %v543, 1326507024
        %v558 = vsel %vm546, %v540, %v557
        %v559 = vsel %vm545, %v556, %v558
        %v560 = vshll.u32 %v520, 8
        %v561 = vmul.u32.u64.compose %v560, %v559
        %v562 = vextract.low.u32 %v561
        %v563 = vextract.high.u32 %v561
        %v564 = vmul.u32.u64.compose %v560, %v555
        %v565 = vextract.low.u32 %v564
        %v566 = vextract.high.u32 %v564
        %v567 = vmul.u32 %v560, %v551
        %v568 = vadd.s32 %v563, %v565
        %vm569 = vc.u32 %v563, %v565
        %v570 = vadd.s32 %v566, 1
        %v571 = vsel %vm569, %v570, %v566
        %v572 = vadd.s32 %v567, %v571
        %v573 = vadd.s32 %v572, 536870912
        %v574 = vshrl.u32 %v573, 30
        %v575 = vshll.u32 %v574, 30
        %v576 = vsub.s32 %v572, %v575
        %vm577 = vcmp.lt.s32.totalorder %v576, 0
        %v578 = vsub.s32 0, %v576
        %v579 = vsel %vm577, %v578, %v576
        %v580 = vclz %v579
        %v581 = vsub.s32 %v580, 2
        %vm582 = vcmp.gt.s32.totalorder 0, %v581
        %v583 = vsel %vm582, 0, %v581
        %v584 = vsub.s32 32, %v583
        %v585 = vshll.u32 %v576, %v583
        %v586 = vshrl.u32 %v568, %v584
        %v587 = vor.u32 %v585, %v586
        %v588 = vsub.s32 4294967266, %v583
        %v589 = vadd.s32 %v588, 127
        %v590 = vshll.u32 %v589, 23
        %v591 = vor.u32 4788187, %v590
        %v592 = vand.u32 2147483647, %v591
        %v594 = vcvt.s32.f32 %v587
        %v595 = vmul.f32 %v594, %v592
        %v596 = vxor.u32 %v595, 2147483648
        %v597 = vsel %vm514, %v596, %v595
        %v598 = vsub.s32 4, %v574
        %v599 = vsel %vm514, %v598, %v574
        %v600 = vsel %vm513, %v496, %v597
        %v601 = vsel %vm513, 0, %v599
        %v602 = vcosq.f32.pop %v600
        %v603 = vsinq.f32.pop %v600
        %vm604 = vweird.f32 %v496
        %v605 = vadd.s32 %v601, 3
        %v606 = vand.u32 %v605, 3
        %vm607 = vcmp.lt.s32.totalorder %v606, 2
        %vm608 = vcmp.eq.s32.totalorder %v606, 0
        %v609 = vxor.u32 %v603, 2147483648
        %v610 = vsel %vm608, %v602, %v609
        %vm611 = vcmp.eq.s32.totalorder %v606, 2
        %v612 = vxor.u32 %v602, 2147483648
        %v613 = vsel %vm611, %v612, %v603
        %v614 = vsel %vm607, %v610, %v613
        %v615 = vsel %vm604, nan, %v614
        %v616 = vand.u32 2147483647, %v497
        %vm617 = vcmp.le.f32.partialorder %v616, 0.7853982
        %vm618 = vcmp.lt.s32.totalorder %v497, 0
        %v619 = vand.u32 %v497, 2139095040
        %v620 = vshrl.u32 %v619, 23
        %v621 = vsub.s32 %v620, 127
        %v622 = vand.u32 2147483647, %v497
        %v623 = vand.u32 %v622, 8388607
        %v624 = vor.u32 %v623, 8388608
        %v625 = vsub.s32 0, %v624
        %v626 = vadd.s32 %v621, 1
        %vm627 = vcmp.gt.s32.totalorder %v626, 0
        %v628 = vsel %vm627, %v626, 0
        %v629 = vshrl.u32 %v628, 5
        %v630 = vand.u32 %v628, 31
        %v631 = vsub.s32 32, %v630
        %v632 = vshrl.u32 683565275, %v631
        %v633 = vshll.u32 683565275, %v630
        %v634 = vshrl.u32 2475754826, %v631
        %v635 = vor.u32 %v633, %v634
        %v636 = vshll.u32 2475754826, %v630
        %v637 = vshrl.u32 2131351028, %v631
        %v638 = vor.u32 %v636, %v637
        %v639 = vshll.u32 2131351028, %v630
        %v640 = vshrl.u32 2102212464, %v631
        %v641 = vor.u32 %v639, %v640
        %v642 = vshll.u32 2102212464, %v630
        %v643 = vshrl.u32 920167782, %v631
        %v644 = vor.u32 %v642, %v643
        %v645 = vshll.u32 920167782, %v630
        %v646 = vshrl.u32 1326507024, %v631
        %v647 = vor.u32 %v645, %v646
        %vm648 = vcmp.lt.s32.totalorder %v629, 1
        %vm649 = vcmp.lt.s32.totalorder %v629, 2
        %vm650 = vcmp.lt.s32.totalorder %v629, 3
        %vm651 = vcmp.lt.s32.totalorder %v629, 4
        %v652 = vsel %vm648, %v632, %v635
        %v653 = vsel %vm651, %v641, 2102212464
        %v654 = vsel %vm650, %v638, %v653
        %v655 = vsel %vm649, %v652, %v654
        %v656 = vsel %vm648, %v635, %v638
        %v657 = vsel %vm651, %v644, 920167782
        %v658 = vsel %vm650, %v641, %v657
        %v659 = vsel %vm649, %v656, %v658
        %v660 = vsel %vm648, %v638, %v641
        %v661 = vsel %vm651, %v647, 1326507024
        %v662 = vsel %vm650, %v644, %v661
        %v663 = vsel %vm649, %v660, %v662
        %v664 = vshll.u32 %v624, 8
        %v665 = vmul.u32.u64.compose %v664, %v663
        %v666 = vextract.low.u32 %v665
        %v667 = vextract.high.u32 %v665
        %v668 = vmul.u32.u64.compose %v664, %v659
        %v669 = vextract.low.u32 %v668
        %v670 = vextract.high.u32 %v668
        %v671 = vmul.u32 %v664, %v655
        %v672 = vadd.s32 %v667, %v669
        %vm673 = vc.u32 %v667, %v669
        %v674 = vadd.s32 %v670, 1
        %v675 = vsel %vm673, %v674, %v670
        %v676 = vadd.s32 %v671, %v675
        %v677 = vadd.s32 %v676, 536870912
        %v678 = vshrl.u32 %v677, 30
        %v679 = vshll.u32 %v678, 30
        %v680 = vsub.s32 %v676, %v679
        %vm681 = vcmp.lt.s32.totalorder %v680, 0
        %v682 = vsub.s32 0, %v680
        %v683 = vsel %vm681, %v682, %v680
        %v684 = vclz %v683
        %v685 = vsub.s32 %v684, 2
        %vm686 = vcmp.gt.s32.totalorder 0, %v685
        %v687 = vsel %vm686, 0, %v685
        %v688 = vsub.s32 32, %v687
        %v689 = vshll.u32 %v680, %v687
        %v690 = vshrl.u32 %v672, %v688
        %v691 = vor.u32 %v689, %v690
        %v692 = vsub.s32 4294967266, %v687
        %v693 = vadd.s32 %v692, 127
        %v694 = vshll.u32 %v693, 23
        %v695 = vor.u32 4788187, %v694
        %v696 = vand.u32 2147483647, %v695
        %v698 = vcvt.s32.f32 %v691
        %v699 = vmul.f32 %v698, %v696
        %v700 = vxor.u32 %v699, 2147483648
        %v701 = vsel %vm618, %v700, %v699
        %v702 = vsub.s32 4, %v678
        %v703 = vsel %vm618, %v702, %v678
        %v704 = vsel %vm617, %v497, %v701
        %v705 = vsel %vm617, 0, %v703
        %v706 = vcosq.f32.pop %v704
        %v707 = vsinq.f32.pop %v704
        %vm708 = vweird.f32 %v497
        %v709 = vadd.s32 %v705, 3
        %v710 = vand.u32 %v709, 3
        %vm711 = vcmp.lt.s32.totalorder %v710, 2
        %vm712 = vcmp.eq.s32.totalorder %v710, 0
        %v713 = vxor.u32 %v707, 2147483648
        %v714 = vsel %vm712, %v706, %v713
        %vm715 = vcmp.eq.s32.totalorder %v710, 2
        %v716 = vxor.u32 %v706, 2147483648
        %v717 = vsel %vm715, %v716, %v707
        %v718 = vsel %vm711, %v714, %v717
        %v719 = vsel %vm708, nan, %v718
        %v720 = vand.u32 2147483647, %v498
        %vm721 = vcmp.le.f32.partialorder %v720, 0.7853982
        %vm722 = vcmp.lt.s32.totalorder %v498, 0
        %v723 = vand.u32 %v498, 2139095040
        %v724 = vshrl.u32 %v723, 23
        %v725 = vsub.s32 %v724, 127
        %v726 = vand.u32 2147483647, %v498
        %v727 = vand.u32 %v726, 8388607
        %v728 = vor.u32 %v727, 8388608
        %v729 = vsub.s32 0, %v728
        %v730 = vadd.s32 %v725, 1
        %vm731 = vcmp.gt.s32.totalorder %v730, 0
        %v732 = vsel %vm731, %v730, 0
        %v733 = vshrl.u32 %v732, 5
        %v734 = vand.u32 %v732, 31
        %v735 = vsub.s32 32, %v734
        %v736 = vshrl.u32 683565275, %v735
        %v737 = vshll.u32 683565275, %v734
        %v738 = vshrl.u32 2475754826, %v735
        %v739 = vor.u32 %v737, %v738
        %v740 = vshll.u32 2475754826, %v734
        %v741 = vshrl.u32 2131351028, %v735
        %v742 = vor.u32 %v740, %v741
        %v743 = vshll.u32 2131351028, %v734
        %v744 = vshrl.u32 2102212464, %v735
        %v745 = vor.u32 %v743, %v744
        %v746 = vshll.u32 2102212464, %v734
        %v747 = vshrl.u32 920167782, %v735
        %v748 = vor.u32 %v746, %v747
        %v749 = vshll.u32 920167782, %v734
        %v750 = vshrl.u32 1326507024, %v735
        %v751 = vor.u32 %v749, %v750
        %vm752 = vcmp.lt.s32.totalorder %v733, 1
        %vm753 = vcmp.lt.s32.totalorder %v733, 2
        %vm754 = vcmp.lt.s32.totalorder %v733, 3
        %vm755 = vcmp.lt.s32.totalorder %v733, 4
        %v756 = vsel %vm752, %v736, %v739
        %v757 = vsel %vm755, %v745, 2102212464
        %v758 = vsel %vm754, %v742, %v757
        %v759 = vsel %vm753, %v756, %v758
        %v760 = vsel %vm752, %v739, %v742
        %v761 = vsel %vm755, %v748, 920167782
        %v762 = vsel %vm754, %v745, %v761
        %v763 = vsel %vm753, %v760, %v762
        %v764 = vsel %vm752, %v742, %v745
        %v765 = vsel %vm755, %v751, 1326507024
        %v766 = vsel %vm754, %v748, %v765
        %v767 = vsel %vm753, %v764, %v766
        %v768 = vshll.u32 %v728, 8
        %v769 = vmul.u32.u64.compose %v768, %v767
        %v770 = vextract.low.u32 %v769
        %v771 = vextract.high.u32 %v769
        %v772 = vmul.u32.u64.compose %v768, %v763
        %v773 = vextract.low.u32 %v772
        %v774 = vextract.high.u32 %v772
        %v775 = vmul.u32 %v768, %v759
        %v776 = vadd.s32 %v771, %v773
        %vm777 = vc.u32 %v771, %v773
        %v778 = vadd.s32 %v774, 1
        %v779 = vsel %vm777, %v778, %v774
        %v780 = vadd.s32 %v775, %v779
        %v781 = vadd.s32 %v780, 536870912
        %v782 = vshrl.u32 %v781, 30
        %v783 = vshll.u32 %v782, 30
        %v784 = vsub.s32 %v780, %v783
        %vm785 = vcmp.lt.s32.totalorder %v784, 0
        %v786 = vsub.s32 0, %v784
        %v787 = vsel %vm785, %v786, %v784
        %v788 = vclz %v787
        %v789 = vsub.s32 %v788, 2
        %vm790 = vcmp.gt.s32.totalorder 0, %v789
        %v791 = vsel %vm790, 0, %v789
        %v792 = vsub.s32 32, %v791
        %v793 = vshll.u32 %v784, %v791
        %v794 = vshrl.u32 %v776, %v792
        %v795 = vor.u32 %v793, %v794
        %v796 = vsub.s32 4294967266, %v791
        %v797 = vadd.s32 %v796, 127
        %v798 = vshll.u32 %v797, 23
        %v799 = vor.u32 4788187, %v798
        %v800 = vand.u32 2147483647, %v799
        %v802 = vcvt.s32.f32 %v795
        %v803 = vmul.f32 %v802, %v800
        %v804 = vxor.u32 %v803, 2147483648
        %v805 = vsel %vm722, %v804, %v803
        %v806 = vsub.s32 4, %v782
        %v807 = vsel %vm722, %v806, %v782
        %v808 = vsel %vm721, %v498, %v805
        %v809 = vsel %vm721, 0, %v807
        %v810 = vcosq.f32.pop %v808
        %v811 = vsinq.f32.pop %v808
        %vm812 = vweird.f32 %v498
        %v813 = vadd.s32 %v809, 3
        %v814 = vand.u32 %v813, 3
        %vm815 = vcmp.lt.s32.totalorder %v814, 2
        %vm816 = vcmp.eq.s32.totalorder %v814, 0
        %v817 = vxor.u32 %v811, 2147483648
        %v818 = vsel %vm816, %v810, %v817
        %vm819 = vcmp.eq.s32.totalorder %v814, 2
        %v820 = vxor.u32 %v810, 2147483648
        %v821 = vsel %vm819, %v820, %v811
        %v822 = vsel %vm815, %v818, %v821
        %v823 = vsel %vm812, nan, %v822
        %v824 = vand.u32 2147483647, %v499
        %vm825 = vcmp.le.f32.partialorder %v824, 0.7853982
        %vm826 = vcmp.lt.s32.totalorder %v499, 0
        %v827 = vand.u32 %v499, 2139095040
        %v828 = vshrl.u32 %v827, 23
        %v829 = vsub.s32 %v828, 127
        %v830 = vand.u32 2147483647, %v499
        %v831 = vand.u32 %v830, 8388607
        %v832 = vor.u32 %v831, 8388608
        %v833 = vsub.s32 0, %v832
        %v834 = vadd.s32 %v829, 1
        %vm835 = vcmp.gt.s32.totalorder %v834, 0
        %v836 = vsel %vm835, %v834, 0
        %v837 = vshrl.u32 %v836, 5
        %v838 = vand.u32 %v836, 31
        %v839 = vsub.s32 32, %v838
        %v840 = vshrl.u32 683565275, %v839
        %v841 = vshll.u32 683565275, %v838
        %v842 = vshrl.u32 2475754826, %v839
        %v843 = vor.u32 %v841, %v842
        %v844 = vshll.u32 2475754826, %v838
        %v845 = vshrl.u32 2131351028, %v839
        %v846 = vor.u32 %v844, %v845
        %v847 = vshll.u32 2131351028, %v838
        %v848 = vshrl.u32 2102212464, %v839
        %v849 = vor.u32 %v847, %v848
        %v850 = vshll.u32 2102212464, %v838
        %v851 = vshrl.u32 920167782, %v839
        %v852 = vor.u32 %v850, %v851
        %v853 = vshll.u32 920167782, %v838
        %v854 = vshrl.u32 1326507024, %v839
        %v855 = vor.u32 %v853, %v854
        %vm856 = vcmp.lt.s32.totalorder %v837, 1
        %vm857 = vcmp.lt.s32.totalorder %v837, 2
        %vm858 = vcmp.lt.s32.totalorder %v837, 3
        %vm859 = vcmp.lt.s32.totalorder %v837, 4
        %v860 = vsel %vm856, %v840, %v843
        %v861 = vsel %vm859, %v849, 2102212464
        %v862 = vsel %vm858, %v846, %v861
        %v863 = vsel %vm857, %v860, %v862
        %v864 = vsel %vm856, %v843, %v846
        %v865 = vsel %vm859, %v852, 920167782
        %v866 = vsel %vm858, %v849, %v865
        %v867 = vsel %vm857, %v864, %v866
        %v868 = vsel %vm856, %v846, %v849
        %v869 = vsel %vm859, %v855, 1326507024
        %v870 = vsel %vm858, %v852, %v869
        %v871 = vsel %vm857, %v868, %v870
        %v872 = vshll.u32 %v832, 8
        %v873 = vmul.u32.u64.compose %v872, %v871
        %v874 = vextract.low.u32 %v873
        %v875 = vextract.high.u32 %v873
        %v876 = vmul.u32.u64.compose %v872, %v867
        %v877 = vextract.low.u32 %v876
        %v878 = vextract.high.u32 %v876
        %v879 = vmul.u32 %v872, %v863
        %v880 = vadd.s32 %v875, %v877
        %vm881 = vc.u32 %v875, %v877
        %v882 = vadd.s32 %v878, 1
        %v883 = vsel %vm881, %v882, %v878
        %v884 = vadd.s32 %v879, %v883
        %v885 = vadd.s32 %v884, 536870912
        %v886 = vshrl.u32 %v885, 30
        %v887 = vshll.u32 %v886, 30
        %v888 = vsub.s32 %v884, %v887
        %vm889 = vcmp.lt.s32.totalorder %v888, 0
        %v890 = vsub.s32 0, %v888
        %v891 = vsel %vm889, %v890, %v888
        %v892 = vclz %v891
        %v893 = vsub.s32 %v892, 2
        %vm894 = vcmp.gt.s32.totalorder 0, %v893
        %v895 = vsel %vm894, 0, %v893
        %v896 = vsub.s32 32, %v895
        %v897 = vshll.u32 %v888, %v895
        %v898 = vshrl.u32 %v880, %v896
        %v899 = vor.u32 %v897, %v898
        %v900 = vsub.s32 4294967266, %v895
        %v901 = vadd.s32 %v900, 127
        %v902 = vshll.u32 %v901, 23
        %v903 = vor.u32 4788187, %v902
        %v904 = vand.u32 2147483647, %v903
        %v906 = vcvt.s32.f32 %v899
        %v907 = vmul.f32 %v906, %v904
        %v908 = vxor.u32 %v907, 2147483648
        %v909 = vsel %vm826, %v908, %v907
        %v910 = vsub.s32 4, %v886
        %v911 = vsel %vm826, %v910, %v886
        %v912 = vsel %vm825, %v499, %v909
        %v913 = vsel %vm825, 0, %v911
        %v914 = vcosq.f32.pop %v912
        %v915 = vsinq.f32.pop %v912
        %vm916 = vweird.f32 %v499
        %v917 = vadd.s32 %v913, 3
        %v918 = vand.u32 %v917, 3
        %vm919 = vcmp.lt.s32.totalorder %v918, 2
        %vm920 = vcmp.eq.s32.totalorder %v918, 0
        %v921 = vxor.u32 %v915, 2147483648
        %v922 = vsel %vm920, %v914, %v921
        %vm923 = vcmp.eq.s32.totalorder %v918, 2
        %v924 = vxor.u32 %v914, 2147483648
        %v925 = vsel %vm923, %v924, %v915
        %v926 = vsel %vm919, %v922, %v925
        %v927 = vsel %vm916, nan, %v926
        %v928 = vand.u32 2147483647, %v500
        %vm929 = vcmp.le.f32.partialorder %v928, 0.7853982
        %vm930 = vcmp.lt.s32.totalorder %v500, 0
        %v931 = vand.u32 %v500, 2139095040
        %v932 = vshrl.u32 %v931, 23
        %v933 = vsub.s32 %v932, 127
        %v934 = vand.u32 2147483647, %v500
        %v935 = vand.u32 %v934, 8388607
        %v936 = vor.u32 %v935, 8388608
        %v937 = vsub.s32 0, %v936
        %v938 = vadd.s32 %v933, 1
        %vm939 = vcmp.gt.s32.totalorder %v938, 0
        %v940 = vsel %vm939, %v938, 0
        %v941 = vshrl.u32 %v940, 5
        %v942 = vand.u32 %v940, 31
        %v943 = vsub.s32 32, %v942
        %v944 = vshrl.u32 683565275, %v943
        %v945 = vshll.u32 683565275, %v942
        %v946 = vshrl.u32 2475754826, %v943
        %v947 = vor.u32 %v945, %v946
        %v948 = vshll.u32 2475754826, %v942
        %v949 = vshrl.u32 2131351028, %v943
        %v950 = vor.u32 %v948, %v949
        %v951 = vshll.u32 2131351028, %v942
        %v952 = vshrl.u32 2102212464, %v943
        %v953 = vor.u32 %v951, %v952
        %v954 = vshll.u32 2102212464, %v942
        %v955 = vshrl.u32 920167782, %v943
        %v956 = vor.u32 %v954, %v955
        %v957 = vshll.u32 920167782, %v942
        %v958 = vshrl.u32 1326507024, %v943
        %v959 = vor.u32 %v957, %v958
        %vm960 = vcmp.lt.s32.totalorder %v941, 1
        %vm961 = vcmp.lt.s32.totalorder %v941, 2
        %vm962 = vcmp.lt.s32.totalorder %v941, 3
        %vm963 = vcmp.lt.s32.totalorder %v941, 4
        %v964 = vsel %vm960, %v944, %v947
        %v965 = vsel %vm963, %v953, 2102212464
        %v966 = vsel %vm962, %v950, %v965
        %v967 = vsel %vm961, %v964, %v966
        %v968 = vsel %vm960, %v947, %v950
        %v969 = vsel %vm963, %v956, 920167782
        %v970 = vsel %vm962, %v953, %v969
        %v971 = vsel %vm961, %v968, %v970
        %v972 = vsel %vm960, %v950, %v953
        %v973 = vsel %vm963, %v959, 1326507024
        %v974 = vsel %vm962, %v956, %v973
        %v975 = vsel %vm961, %v972, %v974
        %v976 = vshll.u32 %v936, 8
        %v977 = vmul.u32.u64.compose %v976, %v975
        %v978 = vextract.low.u32 %v977
        %v979 = vextract.high.u32 %v977
        %v980 = vmul.u32.u64.compose %v976, %v971
        %v981 = vextract.low.u32 %v980
        %v982 = vextract.high.u32 %v980
        %v983 = vmul.u32 %v976, %v967
        %v984 = vadd.s32 %v979, %v981
        %vm985 = vc.u32 %v979, %v981
        %v986 = vadd.s32 %v982, 1
        %v987 = vsel %vm985, %v986, %v982
        %v988 = vadd.s32 %v983, %v987
        %v989 = vadd.s32 %v988, 536870912
        %v990 = vshrl.u32 %v989, 30
        %v991 = vshll.u32 %v990, 30
        %v992 = vsub.s32 %v988, %v991
        %vm993 = vcmp.lt.s32.totalorder %v992, 0
        %v994 = vsub.s32 0, %v992
        %v995 = vsel %vm993, %v994, %v992
        %v996 = vclz %v995
        %v997 = vsub.s32 %v996, 2
        %vm998 = vcmp.gt.s32.totalorder 0, %v997
        %v999 = vsel %vm998, 0, %v997
        %v1000 = vsub.s32 32, %v999
        %v1001 = vshll.u32 %v992, %v999
        %v1002 = vshrl.u32 %v984, %v1000
        %v1003 = vor.u32 %v1001, %v1002
        %v1004 = vsub.s32 4294967266, %v999
        %v1005 = vadd.s32 %v1004, 127
        %v1006 = vshll.u32 %v1005, 23
        %v1007 = vor.u32 4788187, %v1006
        %v1008 = vand.u32 2147483647, %v1007
        %v1010 = vcvt.s32.f32 %v1003
        %v1011 = vmul.f32 %v1010, %v1008
        %v1012 = vxor.u32 %v1011, 2147483648
        %v1013 = vsel %vm930, %v1012, %v1011
        %v1014 = vsub.s32 4, %v990
        %v1015 = vsel %vm930, %v1014, %v990
        %v1016 = vsel %vm929, %v500, %v1013
        %v1017 = vsel %vm929, 0, %v1015
        %v1018 = vcosq.f32.pop %v1016
        %v1019 = vsinq.f32.pop %v1016
        %vm1020 = vweird.f32 %v500
        %v1021 = vadd.s32 %v1017, 3
        %v1022 = vand.u32 %v1021, 3
        %vm1023 = vcmp.lt.s32.totalorder %v1022, 2
        %vm1024 = vcmp.eq.s32.totalorder %v1022, 0
        %v1025 = vxor.u32 %v1019, 2147483648
        %v1026 = vsel %vm1024, %v1018, %v1025
        %vm1027 = vcmp.eq.s32.totalorder %v1022, 2
        %v1028 = vxor.u32 %v1018, 2147483648
        %v1029 = vsel %vm1027, %v1028, %v1019
        %v1030 = vsel %vm1023, %v1026, %v1029
        %v1031 = vsel %vm1020, nan, %v1030
        %v1032 = vand.u32 2147483647, %v501
        %vm1033 = vcmp.le.f32.partialorder %v1032, 0.7853982
        %vm1034 = vcmp.lt.s32.totalorder %v501, 0
        %v1035 = vand.u32 %v501, 2139095040
        %v1036 = vshrl.u32 %v1035, 23
        %v1037 = vsub.s32 %v1036, 127
        %v1038 = vand.u32 2147483647, %v501
        %v1039 = vand.u32 %v1038, 8388607
        %v1040 = vor.u32 %v1039, 8388608
        %v1041 = vsub.s32 0, %v1040
        %v1042 = vadd.s32 %v1037, 1
        %vm1043 = vcmp.gt.s32.totalorder %v1042, 0
        %v1044 = vsel %vm1043, %v1042, 0
        %v1045 = vshrl.u32 %v1044, 5
        %v1046 = vand.u32 %v1044, 31
        %v1047 = vsub.s32 32, %v1046
        %v1048 = vshrl.u32 683565275, %v1047
        %v1049 = vshll.u32 683565275, %v1046
        %v1050 = vshrl.u32 2475754826, %v1047
        %v1051 = vor.u32 %v1049, %v1050
        %v1052 = vshll.u32 2475754826, %v1046
        %v1053 = vshrl.u32 2131351028, %v1047
        %v1054 = vor.u32 %v1052, %v1053
        %v1055 = vshll.u32 2131351028, %v1046
        %v1056 = vshrl.u32 2102212464, %v1047
        %v1057 = vor.u32 %v1055, %v1056
        %v1058 = vshll.u32 2102212464, %v1046
        %v1059 = vshrl.u32 920167782, %v1047
        %v1060 = vor.u32 %v1058, %v1059
        %v1061 = vshll.u32 920167782, %v1046
        %v1062 = vshrl.u32 1326507024, %v1047
        %v1063 = vor.u32 %v1061, %v1062
        %vm1064 = vcmp.lt.s32.totalorder %v1045, 1
        %vm1065 = vcmp.lt.s32.totalorder %v1045, 2
        %vm1066 = vcmp.lt.s32.totalorder %v1045, 3
        %vm1067 = vcmp.lt.s32.totalorder %v1045, 4
        %v1068 = vsel %vm1064, %v1048, %v1051
        %v1069 = vsel %vm1067, %v1057, 2102212464
        %v1070 = vsel %vm1066, %v1054, %v1069
        %v1071 = vsel %vm1065, %v1068, %v1070
        %v1072 = vsel %vm1064, %v1051, %v1054
        %v1073 = vsel %vm1067, %v1060, 920167782
        %v1074 = vsel %vm1066, %v1057, %v1073
        %v1075 = vsel %vm1065, %v1072, %v1074
        %v1076 = vsel %vm1064, %v1054, %v1057
        %v1077 = vsel %vm1067, %v1063, 1326507024
        %v1078 = vsel %vm1066, %v1060, %v1077
        %v1079 = vsel %vm1065, %v1076, %v1078
        %v1080 = vshll.u32 %v1040, 8
        %v1081 = vmul.u32.u64.compose %v1080, %v1079
        %v1082 = vextract.low.u32 %v1081
        %v1083 = vextract.high.u32 %v1081
        %v1084 = vmul.u32.u64.compose %v1080, %v1075
        %v1085 = vextract.low.u32 %v1084
        %v1086 = vextract.high.u32 %v1084
        %v1087 = vmul.u32 %v1080, %v1071
        %v1088 = vadd.s32 %v1083, %v1085
        %vm1089 = vc.u32 %v1083, %v1085
        %v1090 = vadd.s32 %v1086, 1
        %v1091 = vsel %vm1089, %v1090, %v1086
        %v1092 = vadd.s32 %v1087, %v1091
        %v1093 = vadd.s32 %v1092, 536870912
        %v1094 = vshrl.u32 %v1093, 30
        %v1095 = vshll.u32 %v1094, 30
        %v1096 = vsub.s32 %v1092, %v1095
        %vm1097 = vcmp.lt.s32.totalorder %v1096, 0
        %v1098 = vsub.s32 0, %v1096
        %v1099 = vsel %vm1097, %v1098, %v1096
        %v1100 = vclz %v1099
        %v1101 = vsub.s32 %v1100, 2
        %vm1102 = vcmp.gt.s32.totalorder 0, %v1101
        %v1103 = vsel %vm1102, 0, %v1101
        %v1104 = vsub.s32 32, %v1103
        %v1105 = vshll.u32 %v1096, %v1103
        %v1106 = vshrl.u32 %v1088, %v1104
        %v1107 = vor.u32 %v1105, %v1106
        %v1108 = vsub.s32 4294967266, %v1103
        %v1109 = vadd.s32 %v1108, 127
        %v1110 = vshll.u32 %v1109, 23
        %v1111 = vor.u32 4788187, %v1110
        %v1112 = vand.u32 2147483647, %v1111
        %v1114 = vcvt.s32.f32 %v1107
        %v1115 = vmul.f32 %v1114, %v1112
        %v1116 = vxor.u32 %v1115, 2147483648
        %v1117 = vsel %vm1034, %v1116, %v1115
        %v1118 = vsub.s32 4, %v1094
        %v1119 = vsel %vm1034, %v1118, %v1094
        %v1120 = vsel %vm1033, %v501, %v1117
        %v1121 = vsel %vm1033, 0, %v1119
        %v1122 = vcosq.f32.pop %v1120
        %v1123 = vsinq.f32.pop %v1120
        %vm1124 = vweird.f32 %v501
        %v1125 = vadd.s32 %v1121, 3
        %v1126 = vand.u32 %v1125, 3
        %vm1127 = vcmp.lt.s32.totalorder %v1126, 2
        %vm1128 = vcmp.eq.s32.totalorder %v1126, 0
        %v1129 = vxor.u32 %v1123, 2147483648
        %v1130 = vsel %vm1128, %v1122, %v1129
        %vm1131 = vcmp.eq.s32.totalorder %v1126, 2
        %v1132 = vxor.u32 %v1122, 2147483648
        %v1133 = vsel %vm1131, %v1132, %v1123
        %v1134 = vsel %vm1127, %v1130, %v1133
        %v1135 = vsel %vm1124, nan, %v1134
        %v1136 = vand.u32 2147483647, %v502
        %vm1137 = vcmp.le.f32.partialorder %v1136, 0.7853982
        %vm1138 = vcmp.lt.s32.totalorder %v502, 0
        %v1139 = vand.u32 %v502, 2139095040
        %v1140 = vshrl.u32 %v1139, 23
        %v1141 = vsub.s32 %v1140, 127
        %v1142 = vand.u32 2147483647, %v502
        %v1143 = vand.u32 %v1142, 8388607
        %v1144 = vor.u32 %v1143, 8388608
        %v1145 = vsub.s32 0, %v1144
        %v1146 = vadd.s32 %v1141, 1
        %vm1147 = vcmp.gt.s32.totalorder %v1146, 0
        %v1148 = vsel %vm1147, %v1146, 0
        %v1149 = vshrl.u32 %v1148, 5
        %v1150 = vand.u32 %v1148, 31
        %v1151 = vsub.s32 32, %v1150
        %v1152 = vshrl.u32 683565275, %v1151
        %v1153 = vshll.u32 683565275, %v1150
        %v1154 = vshrl.u32 2475754826, %v1151
        %v1155 = vor.u32 %v1153, %v1154
        %v1156 = vshll.u32 2475754826, %v1150
        %v1157 = vshrl.u32 2131351028, %v1151
        %v1158 = vor.u32 %v1156, %v1157
        %v1159 = vshll.u32 2131351028, %v1150
        %v1160 = vshrl.u32 2102212464, %v1151
        %v1161 = vor.u32 %v1159, %v1160
        %v1162 = vshll.u32 2102212464, %v1150
        %v1163 = vshrl.u32 920167782, %v1151
        %v1164 = vor.u32 %v1162, %v1163
        %v1165 = vshll.u32 920167782, %v1150
        %v1166 = vshrl.u32 1326507024, %v1151
        %v1167 = vor.u32 %v1165, %v1166
        %vm1168 = vcmp.lt.s32.totalorder %v1149, 1
        %vm1169 = vcmp.lt.s32.totalorder %v1149, 2
        %vm1170 = vcmp.lt.s32.totalorder %v1149, 3
        %vm1171 = vcmp.lt.s32.totalorder %v1149, 4
        %v1172 = vsel %vm1168, %v1152, %v1155
        %v1173 = vsel %vm1171, %v1161, 2102212464
        %v1174 = vsel %vm1170, %v1158, %v1173
        %v1175 = vsel %vm1169, %v1172, %v1174
        %v1176 = vsel %vm1168, %v1155, %v1158
        %v1177 = vsel %vm1171, %v1164, 920167782
        %v1178 = vsel %vm1170, %v1161, %v1177
        %v1179 = vsel %vm1169, %v1176, %v1178
        %v1180 = vsel %vm1168, %v1158, %v1161
        %v1181 = vsel %vm1171, %v1167, 1326507024
        %v1182 = vsel %vm1170, %v1164, %v1181
        %v1183 = vsel %vm1169, %v1180, %v1182
        %v1184 = vshll.u32 %v1144, 8
        %v1185 = vmul.u32.u64.compose %v1184, %v1183
        %v1186 = vextract.low.u32 %v1185
        %v1187 = vextract.high.u32 %v1185
        %v1188 = vmul.u32.u64.compose %v1184, %v1179
        %v1189 = vextract.low.u32 %v1188
        %v1190 = vextract.high.u32 %v1188
        %v1191 = vmul.u32 %v1184, %v1175
        %v1192 = vadd.s32 %v1187, %v1189
        %vm1193 = vc.u32 %v1187, %v1189
        %v1194 = vadd.s32 %v1190, 1
        %v1195 = vsel %vm1193, %v1194, %v1190
        %v1196 = vadd.s32 %v1191, %v1195
        %v1197 = vadd.s32 %v1196, 536870912
        %v1198 = vshrl.u32 %v1197, 30
        %v1199 = vshll.u32 %v1198, 30
        %v1200 = vsub.s32 %v1196, %v1199
        %vm1201 = vcmp.lt.s32.totalorder %v1200, 0
        %v1202 = vsub.s32 0, %v1200
        %v1203 = vsel %vm1201, %v1202, %v1200
        %v1204 = vclz %v1203
        %v1205 = vsub.s32 %v1204, 2
        %vm1206 = vcmp.gt.s32.totalorder 0, %v1205
        %v1207 = vsel %vm1206, 0, %v1205
        %v1208 = vsub.s32 32, %v1207
        %v1209 = vshll.u32 %v1200, %v1207
        %v1210 = vshrl.u32 %v1192, %v1208
        %v1211 = vor.u32 %v1209, %v1210
        %v1212 = vsub.s32 4294967266, %v1207
        %v1213 = vadd.s32 %v1212, 127
        %v1214 = vshll.u32 %v1213, 23
        %v1215 = vor.u32 4788187, %v1214
        %v1216 = vand.u32 2147483647, %v1215
        %v1218 = vcvt.s32.f32 %v1211
        %v1219 = vmul.f32 %v1218, %v1216
        %v1220 = vxor.u32 %v1219, 2147483648
        %v1221 = vsel %vm1138, %v1220, %v1219
        %v1222 = vsub.s32 4, %v1198
        %v1223 = vsel %vm1138, %v1222, %v1198
        %v1224 = vsel %vm1137, %v502, %v1221
        %v1225 = vsel %vm1137, 0, %v1223
        %v1226 = vcosq.f32.pop %v1224
        %v1227 = vsinq.f32.pop %v1224
        %vm1228 = vweird.f32 %v502
        %v1229 = vadd.s32 %v1225, 3
        %v1230 = vand.u32 %v1229, 3
        %vm1231 = vcmp.lt.s32.totalorder %v1230, 2
        %vm1232 = vcmp.eq.s32.totalorder %v1230, 0
        %v1233 = vxor.u32 %v1227, 2147483648
        %v1234 = vsel %vm1232, %v1226, %v1233
        %vm1235 = vcmp.eq.s32.totalorder %v1230, 2
        %v1236 = vxor.u32 %v1226, 2147483648
        %v1237 = vsel %vm1235, %v1236, %v1227
        %v1238 = vsel %vm1231, %v1234, %v1237
        %v1239 = vsel %vm1228, nan, %v1238
        %v1240 = vand.u32 2147483647, %v503
        %vm1241 = vcmp.le.f32.partialorder %v1240, 0.7853982
        %vm1242 = vcmp.lt.s32.totalorder %v503, 0
        %v1243 = vand.u32 %v503, 2139095040
        %v1244 = vshrl.u32 %v1243, 23
        %v1245 = vsub.s32 %v1244, 127
        %v1246 = vand.u32 2147483647, %v503
        %v1247 = vand.u32 %v1246, 8388607
        %v1248 = vor.u32 %v1247, 8388608
        %v1249 = vsub.s32 0, %v1248
        %v1250 = vadd.s32 %v1245, 1
        %vm1251 = vcmp.gt.s32.totalorder %v1250, 0
        %v1252 = vsel %vm1251, %v1250, 0
        %v1253 = vshrl.u32 %v1252, 5
        %v1254 = vand.u32 %v1252, 31
        %v1255 = vsub.s32 32, %v1254
        %v1256 = vshrl.u32 683565275, %v1255
        %v1257 = vshll.u32 683565275, %v1254
        %v1258 = vshrl.u32 2475754826, %v1255
        %v1259 = vor.u32 %v1257, %v1258
        %v1260 = vshll.u32 2475754826, %v1254
        %v1261 = vshrl.u32 2131351028, %v1255
        %v1262 = vor.u32 %v1260, %v1261
        %v1263 = vshll.u32 2131351028, %v1254
        %v1264 = vshrl.u32 2102212464, %v1255
        %v1265 = vor.u32 %v1263, %v1264
        %v1266 = vshll.u32 2102212464, %v1254
        %v1267 = vshrl.u32 920167782, %v1255
        %v1268 = vor.u32 %v1266, %v1267
        %v1269 = vshll.u32 920167782, %v1254
        %v1270 = vshrl.u32 1326507024, %v1255
        %v1271 = vor.u32 %v1269, %v1270
        %vm1272 = vcmp.lt.s32.totalorder %v1253, 1
        %vm1273 = vcmp.lt.s32.totalorder %v1253, 2
        %vm1274 = vcmp.lt.s32.totalorder %v1253, 3
        %vm1275 = vcmp.lt.s32.totalorder %v1253, 4
        %v1276 = vsel %vm1272, %v1256, %v1259
        %v1277 = vsel %vm1275, %v1265, 2102212464
        %v1278 = vsel %vm1274, %v1262, %v1277
        %v1279 = vsel %vm1273, %v1276, %v1278
        %v1280 = vsel %vm1272, %v1259, %v1262
        %v1281 = vsel %vm1275, %v1268, 920167782
        %v1282 = vsel %vm1274, %v1265, %v1281
        %v1283 = vsel %vm1273, %v1280, %v1282
        %v1284 = vsel %vm1272, %v1262, %v1265
        %v1285 = vsel %vm1275, %v1271, 1326507024
        %v1286 = vsel %vm1274, %v1268, %v1285
        %v1287 = vsel %vm1273, %v1284, %v1286
        %v1288 = vshll.u32 %v1248, 8
        %v1289 = vmul.u32.u64.compose %v1288, %v1287
        %v1290 = vextract.low.u32 %v1289
        %v1291 = vextract.high.u32 %v1289
        %v1292 = vmul.u32.u64.compose %v1288, %v1283
        %v1293 = vextract.low.u32 %v1292
        %v1294 = vextract.high.u32 %v1292
        %v1295 = vmul.u32 %v1288, %v1279
        %v1296 = vadd.s32 %v1291, %v1293
        %vm1297 = vc.u32 %v1291, %v1293
        %v1298 = vadd.s32 %v1294, 1
        %v1299 = vsel %vm1297, %v1298, %v1294
        %v1300 = vadd.s32 %v1295, %v1299
        %v1301 = vadd.s32 %v1300, 536870912
        %v1302 = vshrl.u32 %v1301, 30
        %v1303 = vshll.u32 %v1302, 30
        %v1304 = vsub.s32 %v1300, %v1303
        %vm1305 = vcmp.lt.s32.totalorder %v1304, 0
        %v1306 = vsub.s32 0, %v1304
        %v1307 = vsel %vm1305, %v1306, %v1304
        %v1308 = vclz %v1307
        %v1309 = vsub.s32 %v1308, 2
        %vm1310 = vcmp.gt.s32.totalorder 0, %v1309
        %v1311 = vsel %vm1310, 0, %v1309
        %v1312 = vsub.s32 32, %v1311
        %v1313 = vshll.u32 %v1304, %v1311
        %v1314 = vshrl.u32 %v1296, %v1312
        %v1315 = vor.u32 %v1313, %v1314
        %v1316 = vsub.s32 4294967266, %v1311
        %v1317 = vadd.s32 %v1316, 127
        %v1318 = vshll.u32 %v1317, 23
        %v1319 = vor.u32 4788187, %v1318
        %v1320 = vand.u32 2147483647, %v1319
        %v1322 = vcvt.s32.f32 %v1315
        %v1323 = vmul.f32 %v1322, %v1320
        %v1324 = vxor.u32 %v1323, 2147483648
        %v1325 = vsel %vm1242, %v1324, %v1323
        %v1326 = vsub.s32 4, %v1302
        %v1327 = vsel %vm1242, %v1326, %v1302
        %v1328 = vsel %vm1241, %v503, %v1325
        %v1329 = vsel %vm1241, 0, %v1327
        %v1330 = vcosq.f32.pop %v1328
        %v1331 = vsinq.f32.pop %v1328
        %vm1332 = vweird.f32 %v503
        %v1333 = vadd.s32 %v1329, 3
        %v1334 = vand.u32 %v1333, 3
        %vm1335 = vcmp.lt.s32.totalorder %v1334, 2
        %vm1336 = vcmp.eq.s32.totalorder %v1334, 0
        %v1337 = vxor.u32 %v1331, 2147483648
        %v1338 = vsel %vm1336, %v1330, %v1337
        %vm1339 = vcmp.eq.s32.totalorder %v1334, 2
        %v1340 = vxor.u32 %v1330, 2147483648
        %v1341 = vsel %vm1339, %v1340, %v1331
        %v1342 = vsel %vm1335, %v1338, %v1341
        %v1343 = vsel %vm1332, nan, %v1342
        %v1344 = vand.u32 2147483647, %v504
        %vm1345 = vcmp.le.f32.partialorder %v1344, 0.7853982
        %vm1346 = vcmp.lt.s32.totalorder %v504, 0
        %v1347 = vand.u32 %v504, 2139095040
        %v1348 = vshrl.u32 %v1347, 23
        %v1349 = vsub.s32 %v1348, 127
        %v1350 = vand.u32 2147483647, %v504
        %v1351 = vand.u32 %v1350, 8388607
        %v1352 = vor.u32 %v1351, 8388608
        %v1353 = vsub.s32 0, %v1352
        %v1354 = vadd.s32 %v1349, 1
        %vm1355 = vcmp.gt.s32.totalorder %v1354, 0
        %v1356 = vsel %vm1355, %v1354, 0
        %v1357 = vshrl.u32 %v1356, 5
        %v1358 = vand.u32 %v1356, 31
        %v1359 = vsub.s32 32, %v1358
        %v1360 = vshrl.u32 683565275, %v1359
        %v1361 = vshll.u32 683565275, %v1358
        %v1362 = vshrl.u32 2475754826, %v1359
        %v1363 = vor.u32 %v1361, %v1362
        %v1364 = vshll.u32 2475754826, %v1358
        %v1365 = vshrl.u32 2131351028, %v1359
        %v1366 = vor.u32 %v1364, %v1365
        %v1367 = vshll.u32 2131351028, %v1358
        %v1368 = vshrl.u32 2102212464, %v1359
        %v1369 = vor.u32 %v1367, %v1368
        %v1370 = vshll.u32 2102212464, %v1358
        %v1371 = vshrl.u32 920167782, %v1359
        %v1372 = vor.u32 %v1370, %v1371
        %v1373 = vshll.u32 920167782, %v1358
        %v1374 = vshrl.u32 1326507024, %v1359
        %v1375 = vor.u32 %v1373, %v1374
        %vm1376 = vcmp.lt.s32.totalorder %v1357, 1
        %vm1377 = vcmp.lt.s32.totalorder %v1357, 2
        %vm1378 = vcmp.lt.s32.totalorder %v1357, 3
        %vm1379 = vcmp.lt.s32.totalorder %v1357, 4
        %v1380 = vsel %vm1376, %v1360, %v1363
        %v1381 = vsel %vm1379, %v1369, 2102212464
        %v1382 = vsel %vm1378, %v1366, %v1381
        %v1383 = vsel %vm1377, %v1380, %v1382
        %v1384 = vsel %vm1376, %v1363, %v1366
        %v1385 = vsel %vm1379, %v1372, 920167782
        %v1386 = vsel %vm1378, %v1369, %v1385
        %v1387 = vsel %vm1377, %v1384, %v1386
        %v1388 = vsel %vm1376, %v1366, %v1369
        %v1389 = vsel %vm1379, %v1375, 1326507024
        %v1390 = vsel %vm1378, %v1372, %v1389
        %v1391 = vsel %vm1377, %v1388, %v1390
        %v1392 = vshll.u32 %v1352, 8
        %v1393 = vmul.u32.u64.compose %v1392, %v1391
        %v1394 = vextract.low.u32 %v1393
        %v1395 = vextract.high.u32 %v1393
        %v1396 = vmul.u32.u64.compose %v1392, %v1387
        %v1397 = vextract.low.u32 %v1396
        %v1398 = vextract.high.u32 %v1396
        %v1399 = vmul.u32 %v1392, %v1383
        %v1400 = vadd.s32 %v1395, %v1397
        %vm1401 = vc.u32 %v1395, %v1397
        %v1402 = vadd.s32 %v1398, 1
        %v1403 = vsel %vm1401, %v1402, %v1398
        %v1404 = vadd.s32 %v1399, %v1403
        %v1405 = vadd.s32 %v1404, 536870912
        %v1406 = vshrl.u32 %v1405, 30
        %v1407 = vshll.u32 %v1406, 30
        %v1408 = vsub.s32 %v1404, %v1407
        %vm1409 = vcmp.lt.s32.totalorder %v1408, 0
        %v1410 = vsub.s32 0, %v1408
        %v1411 = vsel %vm1409, %v1410, %v1408
        %v1412 = vclz %v1411
        %v1413 = vsub.s32 %v1412, 2
        %vm1414 = vcmp.gt.s32.totalorder 0, %v1413
        %v1415 = vsel %vm1414, 0, %v1413
        %v1416 = vsub.s32 32, %v1415
        %v1417 = vshll.u32 %v1408, %v1415
        %v1418 = vshrl.u32 %v1400, %v1416
        %v1419 = vor.u32 %v1417, %v1418
        %v1420 = vsub.s32 4294967266, %v1415
        %v1421 = vadd.s32 %v1420, 127
        %v1422 = vshll.u32 %v1421, 23
        %v1423 = vor.u32 4788187, %v1422
        %v1424 = vand.u32 2147483647, %v1423
        %v1426 = vcvt.s32.f32 %v1419
        %v1427 = vmul.f32 %v1426, %v1424
        %v1428 = vxor.u32 %v1427, 2147483648
        %v1429 = vsel %vm1346, %v1428, %v1427
        %v1430 = vsub.s32 4, %v1406
        %v1431 = vsel %vm1346, %v1430, %v1406
        %v1432 = vsel %vm1345, %v504, %v1429
        %v1433 = vsel %vm1345, 0, %v1431
        %v1434 = vcosq.f32.pop %v1432
        %v1435 = vsinq.f32.pop %v1432
        %vm1436 = vweird.f32 %v504
        %v1437 = vadd.s32 %v1433, 3
        %v1438 = vand.u32 %v1437, 3
        %vm1439 = vcmp.lt.s32.totalorder %v1438, 2
        %vm1440 = vcmp.eq.s32.totalorder %v1438, 0
        %v1441 = vxor.u32 %v1435, 2147483648
        %v1442 = vsel %vm1440, %v1434, %v1441
        %vm1443 = vcmp.eq.s32.totalorder %v1438, 2
        %v1444 = vxor.u32 %v1434, 2147483648
        %v1445 = vsel %vm1443, %v1444, %v1435
        %v1446 = vsel %vm1439, %v1442, %v1445
        %v1447 = vsel %vm1436, nan, %v1446
        %v1448 = vand.u32 2147483647, %v505
        %vm1449 = vcmp.le.f32.partialorder %v1448, 0.7853982
        %vm1450 = vcmp.lt.s32.totalorder %v505, 0
        %v1451 = vand.u32 %v505, 2139095040
        %v1452 = vshrl.u32 %v1451, 23
        %v1453 = vsub.s32 %v1452, 127
        %v1454 = vand.u32 2147483647, %v505
        %v1455 = vand.u32 %v1454, 8388607
        %v1456 = vor.u32 %v1455, 8388608
        %v1457 = vsub.s32 0, %v1456
        %v1458 = vadd.s32 %v1453, 1
        %vm1459 = vcmp.gt.s32.totalorder %v1458, 0
        %v1460 = vsel %vm1459, %v1458, 0
        %v1461 = vshrl.u32 %v1460, 5
        %v1462 = vand.u32 %v1460, 31
        %v1463 = vsub.s32 32, %v1462
        %v1464 = vshrl.u32 683565275, %v1463
        %v1465 = vshll.u32 683565275, %v1462
        %v1466 = vshrl.u32 2475754826, %v1463
        %v1467 = vor.u32 %v1465, %v1466
        %v1468 = vshll.u32 2475754826, %v1462
        %v1469 = vshrl.u32 2131351028, %v1463
        %v1470 = vor.u32 %v1468, %v1469
        %v1471 = vshll.u32 2131351028, %v1462
        %v1472 = vshrl.u32 2102212464, %v1463
        %v1473 = vor.u32 %v1471, %v1472
        %v1474 = vshll.u32 2102212464, %v1462
        %v1475 = vshrl.u32 920167782, %v1463
        %v1476 = vor.u32 %v1474, %v1475
        %v1477 = vshll.u32 920167782, %v1462
        %v1478 = vshrl.u32 1326507024, %v1463
        %v1479 = vor.u32 %v1477, %v1478
        %vm1480 = vcmp.lt.s32.totalorder %v1461, 1
        %vm1481 = vcmp.lt.s32.totalorder %v1461, 2
        %vm1482 = vcmp.lt.s32.totalorder %v1461, 3
        %vm1483 = vcmp.lt.s32.totalorder %v1461, 4
        %v1484 = vsel %vm1480, %v1464, %v1467
        %v1485 = vsel %vm1483, %v1473, 2102212464
        %v1486 = vsel %vm1482, %v1470, %v1485
        %v1487 = vsel %vm1481, %v1484, %v1486
        %v1488 = vsel %vm1480, %v1467, %v1470
        %v1489 = vsel %vm1483, %v1476, 920167782
        %v1490 = vsel %vm1482, %v1473, %v1489
        %v1491 = vsel %vm1481, %v1488, %v1490
        %v1492 = vsel %vm1480, %v1470, %v1473
        %v1493 = vsel %vm1483, %v1479, 1326507024
        %v1494 = vsel %vm1482, %v1476, %v1493
        %v1495 = vsel %vm1481, %v1492, %v1494
        %v1496 = vshll.u32 %v1456, 8
        %v1497 = vmul.u32.u64.compose %v1496, %v1495
        %v1498 = vextract.low.u32 %v1497
        %v1499 = vextract.high.u32 %v1497
        %v1500 = vmul.u32.u64.compose %v1496, %v1491
        %v1501 = vextract.low.u32 %v1500
        %v1502 = vextract.high.u32 %v1500
        %v1503 = vmul.u32 %v1496, %v1487
        %v1504 = vadd.s32 %v1499, %v1501
        %vm1505 = vc.u32 %v1499, %v1501
        %v1506 = vadd.s32 %v1502, 1
        %v1507 = vsel %vm1505, %v1506, %v1502
        %v1508 = vadd.s32 %v1503, %v1507
        %v1509 = vadd.s32 %v1508, 536870912
        %v1510 = vshrl.u32 %v1509, 30
        %v1511 = vshll.u32 %v1510, 30
        %v1512 = vsub.s32 %v1508, %v1511
        %vm1513 = vcmp.lt.s32.totalorder %v1512, 0
        %v1514 = vsub.s32 0, %v1512
        %v1515 = vsel %vm1513, %v1514, %v1512
        %v1516 = vclz %v1515
        %v1517 = vsub.s32 %v1516, 2
        %vm1518 = vcmp.gt.s32.totalorder 0, %v1517
        %v1519 = vsel %vm1518, 0, %v1517
        %v1520 = vsub.s32 32, %v1519
        %v1521 = vshll.u32 %v1512, %v1519
        %v1522 = vshrl.u32 %v1504, %v1520
        %v1523 = vor.u32 %v1521, %v1522
        %v1524 = vsub.s32 4294967266, %v1519
        %v1525 = vadd.s32 %v1524, 127
        %v1526 = vshll.u32 %v1525, 23
        %v1527 = vor.u32 4788187, %v1526
        %v1528 = vand.u32 2147483647, %v1527
        %v1530 = vcvt.s32.f32 %v1523
        %v1531 = vmul.f32 %v1530, %v1528
        %v1532 = vxor.u32 %v1531, 2147483648
        %v1533 = vsel %vm1450, %v1532, %v1531
        %v1534 = vsub.s32 4, %v1510
        %v1535 = vsel %vm1450, %v1534, %v1510
        %v1536 = vsel %vm1449, %v505, %v1533
        %v1537 = vsel %vm1449, 0, %v1535
        %v1538 = vcosq.f32.pop %v1536
        %v1539 = vsinq.f32.pop %v1536
        %vm1540 = vweird.f32 %v505
        %v1541 = vadd.s32 %v1537, 3
        %v1542 = vand.u32 %v1541, 3
        %vm1543 = vcmp.lt.s32.totalorder %v1542, 2
        %vm1544 = vcmp.eq.s32.totalorder %v1542, 0
        %v1545 = vxor.u32 %v1539, 2147483648
        %v1546 = vsel %vm1544, %v1538, %v1545
        %vm1547 = vcmp.eq.s32.totalorder %v1542, 2
        %v1548 = vxor.u32 %v1538, 2147483648
        %v1549 = vsel %vm1547, %v1548, %v1539
        %v1550 = vsel %vm1543, %v1546, %v1549
        %v1551 = vsel %vm1540, nan, %v1550
        %v1552 = vand.u32 2147483647, %v506
        %vm1553 = vcmp.le.f32.partialorder %v1552, 0.7853982
        %vm1554 = vcmp.lt.s32.totalorder %v506, 0
        %v1555 = vand.u32 %v506, 2139095040
        %v1556 = vshrl.u32 %v1555, 23
        %v1557 = vsub.s32 %v1556, 127
        %v1558 = vand.u32 2147483647, %v506
        %v1559 = vand.u32 %v1558, 8388607
        %v1560 = vor.u32 %v1559, 8388608
        %v1561 = vsub.s32 0, %v1560
        %v1562 = vadd.s32 %v1557, 1
        %vm1563 = vcmp.gt.s32.totalorder %v1562, 0
        %v1564 = vsel %vm1563, %v1562, 0
        %v1565 = vshrl.u32 %v1564, 5
        %v1566 = vand.u32 %v1564, 31
        %v1567 = vsub.s32 32, %v1566
        %v1568 = vshrl.u32 683565275, %v1567
        %v1569 = vshll.u32 683565275, %v1566
        %v1570 = vshrl.u32 2475754826, %v1567
        %v1571 = vor.u32 %v1569, %v1570
        %v1572 = vshll.u32 2475754826, %v1566
        %v1573 = vshrl.u32 2131351028, %v1567
        %v1574 = vor.u32 %v1572, %v1573
        %v1575 = vshll.u32 2131351028, %v1566
        %v1576 = vshrl.u32 2102212464, %v1567
        %v1577 = vor.u32 %v1575, %v1576
        %v1578 = vshll.u32 2102212464, %v1566
        %v1579 = vshrl.u32 920167782, %v1567
        %v1580 = vor.u32 %v1578, %v1579
        %v1581 = vshll.u32 920167782, %v1566
        %v1582 = vshrl.u32 1326507024, %v1567
        %v1583 = vor.u32 %v1581, %v1582
        %vm1584 = vcmp.lt.s32.totalorder %v1565, 1
        %vm1585 = vcmp.lt.s32.totalorder %v1565, 2
        %vm1586 = vcmp.lt.s32.totalorder %v1565, 3
        %vm1587 = vcmp.lt.s32.totalorder %v1565, 4
        %v1588 = vsel %vm1584, %v1568, %v1571
        %v1589 = vsel %vm1587, %v1577, 2102212464
        %v1590 = vsel %vm1586, %v1574, %v1589
        %v1591 = vsel %vm1585, %v1588, %v1590
        %v1592 = vsel %vm1584, %v1571, %v1574
        %v1593 = vsel %vm1587, %v1580, 920167782
        %v1594 = vsel %vm1586, %v1577, %v1593
        %v1595 = vsel %vm1585, %v1592, %v1594
        %v1596 = vsel %vm1584, %v1574, %v1577
        %v1597 = vsel %vm1587, %v1583, 1326507024
        %v1598 = vsel %vm1586, %v1580, %v1597
        %v1599 = vsel %vm1585, %v1596, %v1598
        %v1600 = vshll.u32 %v1560, 8
        %v1601 = vmul.u32.u64.compose %v1600, %v1599
        %v1602 = vextract.low.u32 %v1601
        %v1603 = vextract.high.u32 %v1601
        %v1604 = vmul.u32.u64.compose %v1600, %v1595
        %v1605 = vextract.low.u32 %v1604
        %v1606 = vextract.high.u32 %v1604
        %v1607 = vmul.u32 %v1600, %v1591
        %v1608 = vadd.s32 %v1603, %v1605
        %vm1609 = vc.u32 %v1603, %v1605
        %v1610 = vadd.s32 %v1606, 1
        %v1611 = vsel %vm1609, %v1610, %v1606
        %v1612 = vadd.s32 %v1607, %v1611
        %v1613 = vadd.s32 %v1612, 536870912
        %v1614 = vshrl.u32 %v1613, 30
        %v1615 = vshll.u32 %v1614, 30
        %v1616 = vsub.s32 %v1612, %v1615
        %vm1617 = vcmp.lt.s32.totalorder %v1616, 0
        %v1618 = vsub.s32 0, %v1616
        %v1619 = vsel %vm1617, %v1618, %v1616
        %v1620 = vclz %v1619
        %v1621 = vsub.s32 %v1620, 2
        %vm1622 = vcmp.gt.s32.totalorder 0, %v1621
        %v1623 = vsel %vm1622, 0, %v1621
        %v1624 = vsub.s32 32, %v1623
        %v1625 = vshll.u32 %v1616, %v1623
        %v1626 = vshrl.u32 %v1608, %v1624
        %v1627 = vor.u32 %v1625, %v1626
        %v1628 = vsub.s32 4294967266, %v1623
        %v1629 = vadd.s32 %v1628, 127
        %v1630 = vshll.u32 %v1629, 23
        %v1631 = vor.u32 4788187, %v1630
        %v1632 = vand.u32 2147483647, %v1631
        %v1634 = vcvt.s32.f32 %v1627
        %v1635 = vmul.f32 %v1634, %v1632
        %v1636 = vxor.u32 %v1635, 2147483648
        %v1637 = vsel %vm1554, %v1636, %v1635
        %v1638 = vsub.s32 4, %v1614
        %v1639 = vsel %vm1554, %v1638, %v1614
        %v1640 = vsel %vm1553, %v506, %v1637
        %v1641 = vsel %vm1553, 0, %v1639
        %v1642 = vcosq.f32.pop %v1640
        %v1643 = vsinq.f32.pop %v1640
        %vm1644 = vweird.f32 %v506
        %v1645 = vadd.s32 %v1641, 3
        %v1646 = vand.u32 %v1645, 3
        %vm1647 = vcmp.lt.s32.totalorder %v1646, 2
        %vm1648 = vcmp.eq.s32.totalorder %v1646, 0
        %v1649 = vxor.u32 %v1643, 2147483648
        %v1650 = vsel %vm1648, %v1642, %v1649
        %vm1651 = vcmp.eq.s32.totalorder %v1646, 2
        %v1652 = vxor.u32 %v1642, 2147483648
        %v1653 = vsel %vm1651, %v1652, %v1643
        %v1654 = vsel %vm1647, %v1650, %v1653
        %v1655 = vsel %vm1644, nan, %v1654
        %v1656 = vand.u32 2147483647, %v507
        %vm1657 = vcmp.le.f32.partialorder %v1656, 0.7853982
        %vm1658 = vcmp.lt.s32.totalorder %v507, 0
        %v1659 = vand.u32 %v507, 2139095040
        %v1660 = vshrl.u32 %v1659, 23
        %v1661 = vsub.s32 %v1660, 127
        %v1662 = vand.u32 2147483647, %v507
        %v1663 = vand.u32 %v1662, 8388607
        %v1664 = vor.u32 %v1663, 8388608
        %v1665 = vsub.s32 0, %v1664
        %v1666 = vadd.s32 %v1661, 1
        %vm1667 = vcmp.gt.s32.totalorder %v1666, 0
        %v1668 = vsel %vm1667, %v1666, 0
        %v1669 = vshrl.u32 %v1668, 5
        %v1670 = vand.u32 %v1668, 31
        %v1671 = vsub.s32 32, %v1670
        %v1672 = vshrl.u32 683565275, %v1671
        %v1673 = vshll.u32 683565275, %v1670
        %v1674 = vshrl.u32 2475754826, %v1671
        %v1675 = vor.u32 %v1673, %v1674
        %v1676 = vshll.u32 2475754826, %v1670
        %v1677 = vshrl.u32 2131351028, %v1671
        %v1678 = vor.u32 %v1676, %v1677
        %v1679 = vshll.u32 2131351028, %v1670
        %v1680 = vshrl.u32 2102212464, %v1671
        %v1681 = vor.u32 %v1679, %v1680
        %v1682 = vshll.u32 2102212464, %v1670
        %v1683 = vshrl.u32 920167782, %v1671
        %v1684 = vor.u32 %v1682, %v1683
        %v1685 = vshll.u32 920167782, %v1670
        %v1686 = vshrl.u32 1326507024, %v1671
        %v1687 = vor.u32 %v1685, %v1686
        %vm1688 = vcmp.lt.s32.totalorder %v1669, 1
        %vm1689 = vcmp.lt.s32.totalorder %v1669, 2
        %vm1690 = vcmp.lt.s32.totalorder %v1669, 3
        %vm1691 = vcmp.lt.s32.totalorder %v1669, 4
        %v1692 = vsel %vm1688, %v1672, %v1675
        %v1693 = vsel %vm1691, %v1681, 2102212464
        %v1694 = vsel %vm1690, %v1678, %v1693
        %v1695 = vsel %vm1689, %v1692, %v1694
        %v1696 = vsel %vm1688, %v1675, %v1678
        %v1697 = vsel %vm1691, %v1684, 920167782
        %v1698 = vsel %vm1690, %v1681, %v1697
        %v1699 = vsel %vm1689, %v1696, %v1698
        %v1700 = vsel %vm1688, %v1678, %v1681
        %v1701 = vsel %vm1691, %v1687, 1326507024
        %v1702 = vsel %vm1690, %v1684, %v1701
        %v1703 = vsel %vm1689, %v1700, %v1702
        %v1704 = vshll.u32 %v1664, 8
        %v1705 = vmul.u32.u64.compose %v1704, %v1703
        %v1706 = vextract.low.u32 %v1705
        %v1707 = vextract.high.u32 %v1705
        %v1708 = vmul.u32.u64.compose %v1704, %v1699
        %v1709 = vextract.low.u32 %v1708
        %v1710 = vextract.high.u32 %v1708
        %v1711 = vmul.u32 %v1704, %v1695
        %v1712 = vadd.s32 %v1707, %v1709
        %vm1713 = vc.u32 %v1707, %v1709
        %v1714 = vadd.s32 %v1710, 1
        %v1715 = vsel %vm1713, %v1714, %v1710
        %v1716 = vadd.s32 %v1711, %v1715
        %v1717 = vadd.s32 %v1716, 536870912
        %v1718 = vshrl.u32 %v1717, 30
        %v1719 = vshll.u32 %v1718, 30
        %v1720 = vsub.s32 %v1716, %v1719
        %vm1721 = vcmp.lt.s32.totalorder %v1720, 0
        %v1722 = vsub.s32 0, %v1720
        %v1723 = vsel %vm1721, %v1722, %v1720
        %v1724 = vclz %v1723
        %v1725 = vsub.s32 %v1724, 2
        %vm1726 = vcmp.gt.s32.totalorder 0, %v1725
        %v1727 = vsel %vm1726, 0, %v1725
        %v1728 = vsub.s32 32, %v1727
        %v1729 = vshll.u32 %v1720, %v1727
        %v1730 = vshrl.u32 %v1712, %v1728
        %v1731 = vor.u32 %v1729, %v1730
        %v1732 = vsub.s32 4294967266, %v1727
        %v1733 = vadd.s32 %v1732, 127
        %v1734 = vshll.u32 %v1733, 23
        %v1735 = vor.u32 4788187, %v1734
        %v1736 = vand.u32 2147483647, %v1735
        %v1738 = vcvt.s32.f32 %v1731
        %v1739 = vmul.f32 %v1738, %v1736
        %v1740 = vxor.u32 %v1739, 2147483648
        %v1741 = vsel %vm1658, %v1740, %v1739
        %v1742 = vsub.s32 4, %v1718
        %v1743 = vsel %vm1658, %v1742, %v1718
        %v1744 = vsel %vm1657, %v507, %v1741
        %v1745 = vsel %vm1657, 0, %v1743
        %v1746 = vcosq.f32.pop %v1744
        %v1747 = vsinq.f32.pop %v1744
        %vm1748 = vweird.f32 %v507
        %v1749 = vadd.s32 %v1745, 3
        %v1750 = vand.u32 %v1749, 3
        %vm1751 = vcmp.lt.s32.totalorder %v1750, 2
        %vm1752 = vcmp.eq.s32.totalorder %v1750, 0
        %v1753 = vxor.u32 %v1747, 2147483648
        %v1754 = vsel %vm1752, %v1746, %v1753
        %vm1755 = vcmp.eq.s32.totalorder %v1750, 2
        %v1756 = vxor.u32 %v1746, 2147483648
        %v1757 = vsel %vm1755, %v1756, %v1747
        %v1758 = vsel %vm1751, %v1754, %v1757
        %v1759 = vsel %vm1748, nan, %v1758
        %v1760 = vand.u32 2147483647, %v508
        %vm1761 = vcmp.le.f32.partialorder %v1760, 0.7853982
        %vm1762 = vcmp.lt.s32.totalorder %v508, 0
        %v1763 = vand.u32 %v508, 2139095040
        %v1764 = vshrl.u32 %v1763, 23
        %v1765 = vsub.s32 %v1764, 127
        %v1766 = vand.u32 2147483647, %v508
        %v1767 = vand.u32 %v1766, 8388607
        %v1768 = vor.u32 %v1767, 8388608
        %v1769 = vsub.s32 0, %v1768
        %v1770 = vadd.s32 %v1765, 1
        %vm1771 = vcmp.gt.s32.totalorder %v1770, 0
        %v1772 = vsel %vm1771, %v1770, 0
        %v1773 = vshrl.u32 %v1772, 5
        %v1774 = vand.u32 %v1772, 31
        %v1775 = vsub.s32 32, %v1774
        %v1776 = vshrl.u32 683565275, %v1775
        %v1777 = vshll.u32 683565275, %v1774
        %v1778 = vshrl.u32 2475754826, %v1775
        %v1779 = vor.u32 %v1777, %v1778
        %v1780 = vshll.u32 2475754826, %v1774
        %v1781 = vshrl.u32 2131351028, %v1775
        %v1782 = vor.u32 %v1780, %v1781
        %v1783 = vshll.u32 2131351028, %v1774
        %v1784 = vshrl.u32 2102212464, %v1775
        %v1785 = vor.u32 %v1783, %v1784
        %v1786 = vshll.u32 2102212464, %v1774
        %v1787 = vshrl.u32 920167782, %v1775
        %v1788 = vor.u32 %v1786, %v1787
        %v1789 = vshll.u32 920167782, %v1774
        %v1790 = vshrl.u32 1326507024, %v1775
        %v1791 = vor.u32 %v1789, %v1790
        %vm1792 = vcmp.lt.s32.totalorder %v1773, 1
        %vm1793 = vcmp.lt.s32.totalorder %v1773, 2
        %vm1794 = vcmp.lt.s32.totalorder %v1773, 3
        %vm1795 = vcmp.lt.s32.totalorder %v1773, 4
        %v1796 = vsel %vm1792, %v1776, %v1779
        %v1797 = vsel %vm1795, %v1785, 2102212464
        %v1798 = vsel %vm1794, %v1782, %v1797
        %v1799 = vsel %vm1793, %v1796, %v1798
        %v1800 = vsel %vm1792, %v1779, %v1782
        %v1801 = vsel %vm1795, %v1788, 920167782
        %v1802 = vsel %vm1794, %v1785, %v1801
        %v1803 = vsel %vm1793, %v1800, %v1802
        %v1804 = vsel %vm1792, %v1782, %v1785
        %v1805 = vsel %vm1795, %v1791, 1326507024
        %v1806 = vsel %vm1794, %v1788, %v1805
        %v1807 = vsel %vm1793, %v1804, %v1806
        %v1808 = vshll.u32 %v1768, 8
        %v1809 = vmul.u32.u64.compose %v1808, %v1807
        %v1810 = vextract.low.u32 %v1809
        %v1811 = vextract.high.u32 %v1809
        %v1812 = vmul.u32.u64.compose %v1808, %v1803
        %v1813 = vextract.low.u32 %v1812
        %v1814 = vextract.high.u32 %v1812
        %v1815 = vmul.u32 %v1808, %v1799
        %v1816 = vadd.s32 %v1811, %v1813
        %vm1817 = vc.u32 %v1811, %v1813
        %v1818 = vadd.s32 %v1814, 1
        %v1819 = vsel %vm1817, %v1818, %v1814
        %v1820 = vadd.s32 %v1815, %v1819
        %v1821 = vadd.s32 %v1820, 536870912
        %v1822 = vshrl.u32 %v1821, 30
        %v1823 = vshll.u32 %v1822, 30
        %v1824 = vsub.s32 %v1820, %v1823
        %vm1825 = vcmp.lt.s32.totalorder %v1824, 0
        %v1826 = vsub.s32 0, %v1824
        %v1827 = vsel %vm1825, %v1826, %v1824
        %v1828 = vclz %v1827
        %v1829 = vsub.s32 %v1828, 2
        %vm1830 = vcmp.gt.s32.totalorder 0, %v1829
        %v1831 = vsel %vm1830, 0, %v1829
        %v1832 = vsub.s32 32, %v1831
        %v1833 = vshll.u32 %v1824, %v1831
        %v1834 = vshrl.u32 %v1816, %v1832
        %v1835 = vor.u32 %v1833, %v1834
        %v1836 = vsub.s32 4294967266, %v1831
        %v1837 = vadd.s32 %v1836, 127
        %v1838 = vshll.u32 %v1837, 23
        %v1839 = vor.u32 4788187, %v1838
        %v1840 = vand.u32 2147483647, %v1839
        %v1842 = vcvt.s32.f32 %v1835
        %v1843 = vmul.f32 %v1842, %v1840
        %v1844 = vxor.u32 %v1843, 2147483648
        %v1845 = vsel %vm1762, %v1844, %v1843
        %v1846 = vsub.s32 4, %v1822
        %v1847 = vsel %vm1762, %v1846, %v1822
        %v1848 = vsel %vm1761, %v508, %v1845
        %v1849 = vsel %vm1761, 0, %v1847
        %v1850 = vcosq.f32.pop %v1848
        %v1851 = vsinq.f32.pop %v1848
        %vm1852 = vweird.f32 %v508
        %v1853 = vadd.s32 %v1849, 3
        %v1854 = vand.u32 %v1853, 3
        %vm1855 = vcmp.lt.s32.totalorder %v1854, 2
        %vm1856 = vcmp.eq.s32.totalorder %v1854, 0
        %v1857 = vxor.u32 %v1851, 2147483648
        %v1858 = vsel %vm1856, %v1850, %v1857
        %vm1859 = vcmp.eq.s32.totalorder %v1854, 2
        %v1860 = vxor.u32 %v1850, 2147483648
        %v1861 = vsel %vm1859, %v1860, %v1851
        %v1862 = vsel %vm1855, %v1858, %v1861
        %v1863 = vsel %vm1852, nan, %v1862
        %v1864 = vand.u32 2147483647, %v509
        %vm1865 = vcmp.le.f32.partialorder %v1864, 0.7853982
        %vm1866 = vcmp.lt.s32.totalorder %v509, 0
        %v1867 = vand.u32 %v509, 2139095040
        %v1868 = vshrl.u32 %v1867, 23
        %v1869 = vsub.s32 %v1868, 127
        %v1870 = vand.u32 2147483647, %v509
        %v1871 = vand.u32 %v1870, 8388607
        %v1872 = vor.u32 %v1871, 8388608
        %v1873 = vsub.s32 0, %v1872
        %v1874 = vadd.s32 %v1869, 1
        %vm1875 = vcmp.gt.s32.totalorder %v1874, 0
        %v1876 = vsel %vm1875, %v1874, 0
        %v1877 = vshrl.u32 %v1876, 5
        %v1878 = vand.u32 %v1876, 31
        %v1879 = vsub.s32 32, %v1878
        %v1880 = vshrl.u32 683565275, %v1879
        %v1881 = vshll.u32 683565275, %v1878
        %v1882 = vshrl.u32 2475754826, %v1879
        %v1883 = vor.u32 %v1881, %v1882
        %v1884 = vshll.u32 2475754826, %v1878
        %v1885 = vshrl.u32 2131351028, %v1879
        %v1886 = vor.u32 %v1884, %v1885
        %v1887 = vshll.u32 2131351028, %v1878
        %v1888 = vshrl.u32 2102212464, %v1879
        %v1889 = vor.u32 %v1887, %v1888
        %v1890 = vshll.u32 2102212464, %v1878
        %v1891 = vshrl.u32 920167782, %v1879
        %v1892 = vor.u32 %v1890, %v1891
        %v1893 = vshll.u32 920167782, %v1878
        %v1894 = vshrl.u32 1326507024, %v1879
        %v1895 = vor.u32 %v1893, %v1894
        %vm1896 = vcmp.lt.s32.totalorder %v1877, 1
        %vm1897 = vcmp.lt.s32.totalorder %v1877, 2
        %vm1898 = vcmp.lt.s32.totalorder %v1877, 3
        %vm1899 = vcmp.lt.s32.totalorder %v1877, 4
        %v1900 = vsel %vm1896, %v1880, %v1883
        %v1901 = vsel %vm1899, %v1889, 2102212464
        %v1902 = vsel %vm1898, %v1886, %v1901
        %v1903 = vsel %vm1897, %v1900, %v1902
        %v1904 = vsel %vm1896, %v1883, %v1886
        %v1905 = vsel %vm1899, %v1892, 920167782
        %v1906 = vsel %vm1898, %v1889, %v1905
        %v1907 = vsel %vm1897, %v1904, %v1906
        %v1908 = vsel %vm1896, %v1886, %v1889
        %v1909 = vsel %vm1899, %v1895, 1326507024
        %v1910 = vsel %vm1898, %v1892, %v1909
        %v1911 = vsel %vm1897, %v1908, %v1910
        %v1912 = vshll.u32 %v1872, 8
        %v1913 = vmul.u32.u64.compose %v1912, %v1911
        %v1914 = vextract.low.u32 %v1913
        %v1915 = vextract.high.u32 %v1913
        %v1916 = vmul.u32.u64.compose %v1912, %v1907
        %v1917 = vextract.low.u32 %v1916
        %v1918 = vextract.high.u32 %v1916
        %v1919 = vmul.u32 %v1912, %v1903
        %v1920 = vadd.s32 %v1915, %v1917
        %vm1921 = vc.u32 %v1915, %v1917
        %v1922 = vadd.s32 %v1918, 1
        %v1923 = vsel %vm1921, %v1922, %v1918
        %v1924 = vadd.s32 %v1919, %v1923
        %v1925 = vadd.s32 %v1924, 536870912
        %v1926 = vshrl.u32 %v1925, 30
        %v1927 = vshll.u32 %v1926, 30
        %v1928 = vsub.s32 %v1924, %v1927
        %vm1929 = vcmp.lt.s32.totalorder %v1928, 0
        %v1930 = vsub.s32 0, %v1928
        %v1931 = vsel %vm1929, %v1930, %v1928
        %v1932 = vclz %v1931
        %v1933 = vsub.s32 %v1932, 2
        %vm1934 = vcmp.gt.s32.totalorder 0, %v1933
        %v1935 = vsel %vm1934, 0, %v1933
        %v1936 = vsub.s32 32, %v1935
        %v1937 = vshll.u32 %v1928, %v1935
        %v1938 = vshrl.u32 %v1920, %v1936
        %v1939 = vor.u32 %v1937, %v1938
        %v1940 = vsub.s32 4294967266, %v1935
        %v1941 = vadd.s32 %v1940, 127
        %v1942 = vshll.u32 %v1941, 23
        %v1943 = vor.u32 4788187, %v1942
        %v1944 = vand.u32 2147483647, %v1943
        %v1946 = vcvt.s32.f32 %v1939
        %v1947 = vmul.f32 %v1946, %v1944
        %v1948 = vxor.u32 %v1947, 2147483648
        %v1949 = vsel %vm1866, %v1948, %v1947
        %v1950 = vsub.s32 4, %v1926
        %v1951 = vsel %vm1866, %v1950, %v1926
        %v1952 = vsel %vm1865, %v509, %v1949
        %v1953 = vsel %vm1865, 0, %v1951
        %v1954 = vcosq.f32.pop %v1952
        %v1955 = vsinq.f32.pop %v1952
        %vm1956 = vweird.f32 %v509
        %v1957 = vadd.s32 %v1953, 3
        %v1958 = vand.u32 %v1957, 3
        %vm1959 = vcmp.lt.s32.totalorder %v1958, 2
        %vm1960 = vcmp.eq.s32.totalorder %v1958, 0
        %v1961 = vxor.u32 %v1955, 2147483648
        %v1962 = vsel %vm1960, %v1954, %v1961
        %vm1963 = vcmp.eq.s32.totalorder %v1958, 2
        %v1964 = vxor.u32 %v1954, 2147483648
        %v1965 = vsel %vm1963, %v1964, %v1955
        %v1966 = vsel %vm1959, %v1962, %v1965
        %v1967 = vsel %vm1956, nan, %v1966
        %v1968 = vand.u32 2147483647, %v510
        %vm1969 = vcmp.le.f32.partialorder %v1968, 0.7853982
        %vm1970 = vcmp.lt.s32.totalorder %v510, 0
        %v1971 = vand.u32 %v510, 2139095040
        %v1972 = vshrl.u32 %v1971, 23
        %v1973 = vsub.s32 %v1972, 127
        %v1974 = vand.u32 2147483647, %v510
        %v1975 = vand.u32 %v1974, 8388607
        %v1976 = vor.u32 %v1975, 8388608
        %v1977 = vsub.s32 0, %v1976
        %v1978 = vadd.s32 %v1973, 1
        %vm1979 = vcmp.gt.s32.totalorder %v1978, 0
        %v1980 = vsel %vm1979, %v1978, 0
        %v1981 = vshrl.u32 %v1980, 5
        %v1982 = vand.u32 %v1980, 31
        %v1983 = vsub.s32 32, %v1982
        %v1984 = vshrl.u32 683565275, %v1983
        %v1985 = vshll.u32 683565275, %v1982
        %v1986 = vshrl.u32 2475754826, %v1983
        %v1987 = vor.u32 %v1985, %v1986
        %v1988 = vshll.u32 2475754826, %v1982
        %v1989 = vshrl.u32 2131351028, %v1983
        %v1990 = vor.u32 %v1988, %v1989
        %v1991 = vshll.u32 2131351028, %v1982
        %v1992 = vshrl.u32 2102212464, %v1983
        %v1993 = vor.u32 %v1991, %v1992
        %v1994 = vshll.u32 2102212464, %v1982
        %v1995 = vshrl.u32 920167782, %v1983
        %v1996 = vor.u32 %v1994, %v1995
        %v1997 = vshll.u32 920167782, %v1982
        %v1998 = vshrl.u32 1326507024, %v1983
        %v1999 = vor.u32 %v1997, %v1998
        %vm2000 = vcmp.lt.s32.totalorder %v1981, 1
        %vm2001 = vcmp.lt.s32.totalorder %v1981, 2
        %vm2002 = vcmp.lt.s32.totalorder %v1981, 3
        %vm2003 = vcmp.lt.s32.totalorder %v1981, 4
        %v2004 = vsel %vm2000, %v1984, %v1987
        %v2005 = vsel %vm2003, %v1993, 2102212464
        %v2006 = vsel %vm2002, %v1990, %v2005
        %v2007 = vsel %vm2001, %v2004, %v2006
        %v2008 = vsel %vm2000, %v1987, %v1990
        %v2009 = vsel %vm2003, %v1996, 920167782
        %v2010 = vsel %vm2002, %v1993, %v2009
        %v2011 = vsel %vm2001, %v2008, %v2010
        %v2012 = vsel %vm2000, %v1990, %v1993
        %v2013 = vsel %vm2003, %v1999, 1326507024
        %v2014 = vsel %vm2002, %v1996, %v2013
        %v2015 = vsel %vm2001, %v2012, %v2014
        %v2016 = vshll.u32 %v1976, 8
        %v2017 = vmul.u32.u64.compose %v2016, %v2015
        %v2018 = vextract.low.u32 %v2017
        %v2019 = vextract.high.u32 %v2017
        %v2020 = vmul.u32.u64.compose %v2016, %v2011
        %v2021 = vextract.low.u32 %v2020
        %v2022 = vextract.high.u32 %v2020
        %v2023 = vmul.u32 %v2016, %v2007
        %v2024 = vadd.s32 %v2019, %v2021
        %vm2025 = vc.u32 %v2019, %v2021
        %v2026 = vadd.s32 %v2022, 1
        %v2027 = vsel %vm2025, %v2026, %v2022
        %v2028 = vadd.s32 %v2023, %v2027
        %v2029 = vadd.s32 %v2028, 536870912
        %v2030 = vshrl.u32 %v2029, 30
        %v2031 = vshll.u32 %v2030, 30
        %v2032 = vsub.s32 %v2028, %v2031
        %vm2033 = vcmp.lt.s32.totalorder %v2032, 0
        %v2034 = vsub.s32 0, %v2032
        %v2035 = vsel %vm2033, %v2034, %v2032
        %v2036 = vclz %v2035
        %v2037 = vsub.s32 %v2036, 2
        %vm2038 = vcmp.gt.s32.totalorder 0, %v2037
        %v2039 = vsel %vm2038, 0, %v2037
        %v2040 = vsub.s32 32, %v2039
        %v2041 = vshll.u32 %v2032, %v2039
        %v2042 = vshrl.u32 %v2024, %v2040
        %v2043 = vor.u32 %v2041, %v2042
        %v2044 = vsub.s32 4294967266, %v2039
        %v2045 = vadd.s32 %v2044, 127
        %v2046 = vshll.u32 %v2045, 23
        %v2047 = vor.u32 4788187, %v2046
        %v2048 = vand.u32 2147483647, %v2047
        %v2050 = vcvt.s32.f32 %v2043
        %v2051 = vmul.f32 %v2050, %v2048
        %v2052 = vxor.u32 %v2051, 2147483648
        %v2053 = vsel %vm1970, %v2052, %v2051
        %v2054 = vsub.s32 4, %v2030
        %v2055 = vsel %vm1970, %v2054, %v2030
        %v2056 = vsel %vm1969, %v510, %v2053
        %v2057 = vsel %vm1969, 0, %v2055
        %v2058 = vcosq.f32.pop %v2056
        %v2059 = vsinq.f32.pop %v2056
        %vm2060 = vweird.f32 %v510
        %v2061 = vadd.s32 %v2057, 3
        %v2062 = vand.u32 %v2061, 3
        %vm2063 = vcmp.lt.s32.totalorder %v2062, 2
        %vm2064 = vcmp.eq.s32.totalorder %v2062, 0
        %v2065 = vxor.u32 %v2059, 2147483648
        %v2066 = vsel %vm2064, %v2058, %v2065
        %vm2067 = vcmp.eq.s32.totalorder %v2062, 2
        %v2068 = vxor.u32 %v2058, 2147483648
        %v2069 = vsel %vm2067, %v2068, %v2059
        %v2070 = vsel %vm2063, %v2066, %v2069
        %v2071 = vsel %vm2060, nan, %v2070
        %v2072 = vand.u32 2147483647, %v511
        %vm2073 = vcmp.le.f32.partialorder %v2072, 0.7853982
        %vm2074 = vcmp.lt.s32.totalorder %v511, 0
        %v2075 = vand.u32 %v511, 2139095040
        %v2076 = vshrl.u32 %v2075, 23
        %v2077 = vsub.s32 %v2076, 127
        %v2078 = vand.u32 2147483647, %v511
        %v2079 = vand.u32 %v2078, 8388607
        %v2080 = vor.u32 %v2079, 8388608
        %v2081 = vsub.s32 0, %v2080
        %v2082 = vadd.s32 %v2077, 1
        %vm2083 = vcmp.gt.s32.totalorder %v2082, 0
        %v2084 = vsel %vm2083, %v2082, 0
        %v2085 = vshrl.u32 %v2084, 5
        %v2086 = vand.u32 %v2084, 31
        %v2087 = vsub.s32 32, %v2086
        %v2088 = vshrl.u32 683565275, %v2087
        %v2089 = vshll.u32 683565275, %v2086
        %v2090 = vshrl.u32 2475754826, %v2087
        %v2091 = vor.u32 %v2089, %v2090
        %v2092 = vshll.u32 2475754826, %v2086
        %v2093 = vshrl.u32 2131351028, %v2087
        %v2094 = vor.u32 %v2092, %v2093
        %v2095 = vshll.u32 2131351028, %v2086
        %v2096 = vshrl.u32 2102212464, %v2087
        %v2097 = vor.u32 %v2095, %v2096
        %v2098 = vshll.u32 2102212464, %v2086
        %v2099 = vshrl.u32 920167782, %v2087
        %v2100 = vor.u32 %v2098, %v2099
        %v2101 = vshll.u32 920167782, %v2086
        %v2102 = vshrl.u32 1326507024, %v2087
        %v2103 = vor.u32 %v2101, %v2102
        %vm2104 = vcmp.lt.s32.totalorder %v2085, 1
        %vm2105 = vcmp.lt.s32.totalorder %v2085, 2
        %vm2106 = vcmp.lt.s32.totalorder %v2085, 3
        %vm2107 = vcmp.lt.s32.totalorder %v2085, 4
        %v2108 = vsel %vm2104, %v2088, %v2091
        %v2109 = vsel %vm2107, %v2097, 2102212464
        %v2110 = vsel %vm2106, %v2094, %v2109
        %v2111 = vsel %vm2105, %v2108, %v2110
        %v2112 = vsel %vm2104, %v2091, %v2094
        %v2113 = vsel %vm2107, %v2100, 920167782
        %v2114 = vsel %vm2106, %v2097, %v2113
        %v2115 = vsel %vm2105, %v2112, %v2114
        %v2116 = vsel %vm2104, %v2094, %v2097
        %v2117 = vsel %vm2107, %v2103, 1326507024
        %v2118 = vsel %vm2106, %v2100, %v2117
        %v2119 = vsel %vm2105, %v2116, %v2118
        %v2120 = vshll.u32 %v2080, 8
        %v2121 = vmul.u32.u64.compose %v2120, %v2119
        %v2122 = vextract.low.u32 %v2121
        %v2123 = vextract.high.u32 %v2121
        %v2124 = vmul.u32.u64.compose %v2120, %v2115
        %v2125 = vextract.low.u32 %v2124
        %v2126 = vextract.high.u32 %v2124
        %v2127 = vmul.u32 %v2120, %v2111
        %v2128 = vadd.s32 %v2123, %v2125
        %vm2129 = vc.u32 %v2123, %v2125
        %v2130 = vadd.s32 %v2126, 1
        %v2131 = vsel %vm2129, %v2130, %v2126
        %v2132 = vadd.s32 %v2127, %v2131
        %v2133 = vadd.s32 %v2132, 536870912
        %v2134 = vshrl.u32 %v2133, 30
        %v2135 = vshll.u32 %v2134, 30
        %v2136 = vsub.s32 %v2132, %v2135
        %vm2137 = vcmp.lt.s32.totalorder %v2136, 0
        %v2138 = vsub.s32 0, %v2136
        %v2139 = vsel %vm2137, %v2138, %v2136
        %v2140 = vclz %v2139
        %v2141 = vsub.s32 %v2140, 2
        %vm2142 = vcmp.gt.s32.totalorder 0, %v2141
        %v2143 = vsel %vm2142, 0, %v2141
        %v2144 = vsub.s32 32, %v2143
        %v2145 = vshll.u32 %v2136, %v2143
        %v2146 = vshrl.u32 %v2128, %v2144
        %v2147 = vor.u32 %v2145, %v2146
        %v2148 = vsub.s32 4294967266, %v2143
        %v2149 = vadd.s32 %v2148, 127
        %v2150 = vshll.u32 %v2149, 23
        %v2151 = vor.u32 4788187, %v2150
        %v2152 = vand.u32 2147483647, %v2151
        %v2154 = vcvt.s32.f32 %v2147
        %v2155 = vmul.f32 %v2154, %v2152
        %v2156 = vxor.u32 %v2155, 2147483648
        %v2157 = vsel %vm2074, %v2156, %v2155
        %v2158 = vsub.s32 4, %v2134
        %v2159 = vsel %vm2074, %v2158, %v2134
        %v2160 = vsel %vm2073, %v511, %v2157
        %v2161 = vsel %vm2073, 0, %v2159
        %v2162 = vcosq.f32.pop %v2160
        %v2163 = vsinq.f32.pop %v2160
        %vm2164 = vweird.f32 %v511
        %v2165 = vadd.s32 %v2161, 3
        %v2166 = vand.u32 %v2165, 3
        %vm2167 = vcmp.lt.s32.totalorder %v2166, 2
        %vm2168 = vcmp.eq.s32.totalorder %v2166, 0
        %v2169 = vxor.u32 %v2163, 2147483648
        %v2170 = vsel %vm2168, %v2162, %v2169
        %vm2171 = vcmp.eq.s32.totalorder %v2166, 2
        %v2172 = vxor.u32 %v2162, 2147483648
        %v2173 = vsel %vm2171, %v2172, %v2163
        %v2174 = vsel %vm2167, %v2170, %v2173
        %v2175 = vsel %vm2164, nan, %v2174
        %2176 = vst [vmem:[%s164] sm:$0xff] %v615
        %2177 = vst [vmem:[%s164 + $0x8] sm:$0xff] %v719
        %2178 = vst [vmem:[%s164 + $0x10] sm:$0xff] %v823
        %2179 = vst [vmem:[%s164 + $0x18] sm:$0xff] %v927
        %2180 = vst [vmem:[%s164 + $0x20] sm:$0xff] %v1031
        %2181 = vst [vmem:[%s164 + $0x28] sm:$0xff] %v1135
        %2182 = vst [vmem:[%s164 + $0x30] sm:$0xff] %v1239
        %2183 = vst [vmem:[%s164 + $0x38] sm:$0xff] %v1343
        %2184 = vst [vmem:[%s164 + $0x40] sm:$0xff] %v1447
        %2185 = vst [vmem:[%s164 + $0x48] sm:$0xff] %v1551
        %2186 = vst [vmem:[%s164 + $0x50] sm:$0xff] %v1655
        %2187 = vst [vmem:[%s164 + $0x58] sm:$0xff] %v1759
        %2188 = vst [vmem:[%s164 + $0x60] sm:$0xff] %v1863
        %2189 = vst [vmem:[%s164 + $0x68] sm:$0xff] %v1967
        %2190 = vst [vmem:[%s164 + $0x70] sm:$0xff] %v2071
        %2191 = vst [vmem:[%s164 + $0x78] sm:$0xff] %v2175
        %s2192 = sand.u32 %s93, 1
        %s2193 = scalar_lea.sflag [#allocation3], %s2192
        %s2194 = sand.u32 %s93, 1
        %s2195 = smul.addr %s2194, 128
        %s2196 = scalar_lea.vmem [#allocation2], %s2195
        // Predicated region
        $region33: #{tpu_custom_call.1} parent=31 // pred_check
          %p2197 = pneg %p103
        $region34: #{tpu_custom_call.1} parent=31 // pred_check_branch
          %2199 = sbr.rel (%p2197) target = $region36
        $region35: #{tpu_custom_call.1} parent=31 // pred_region
          %s2200 = smul.u32 16, %s17
          %s2202 = ssub.s32 2048, 2048
          %2203 = vsyncadd %s2193, %s2202
          %s2204 = smul.addr %s2200, 128
          %s2205 = scalar_lea.hbm %s3, %s2204
          %s2206 = sshll.u32 %s2196, 4
          %s2207 = int_to_ptr.vmem [resolvable:$true] %s2206
          %2212 = dma.vmem_to_hbm [thread:$0]  %s2207, 2048, %s2205, %s2193, 128, 128, 8
        $region36: #{tpu_custom_call.1} parent=31 // pred_fallthru
          _
      $region32: #{tpu_custom_call.1} parent=5 // pred_fallthru
        _
      %p2213 = scmp.le.s32.totalorder 2, %s12
      // Predicated region
      $region37: #{tpu_custom_call.1} parent=5 // pred_check
        %p2214 = pneg %p2213
      $region38: #{tpu_custom_call.1} parent=5 // pred_check_branch
        %2216 = sbr.rel (%p2214) target = $region40
      $region39: #{tpu_custom_call.1} parent=5 // pred_region
        %s2217 = ssub.s32 %s12, 2
        // Predicated region
        $region41: #{tpu_custom_call.1} parent=39 // pred_check
          %p2218 = pneg %p109
        $region42: #{tpu_custom_call.1} parent=39 // pred_check_branch
          %2220 = sbr.rel (%p2218) target = $region44
        $region43: #{tpu_custom_call.1} parent=39 // pred_region
          %s2221 = sand.u32 %s94, 1
          %s2222 = scalar_lea.sflag [#allocation3], %s2221
          %s2223 = sand.u32 %s94, 1
          %s2224 = smul.addr %s2223, 128
          %s2225 = scalar_lea.vmem [#allocation2], %s2224
          %2226 = dma.done %s2222, 2048
        $region44: #{tpu_custom_call.1} parent=39 // pred_fallthru
          _
      $region40: #{tpu_custom_call.1} parent=5 // pred_fallthru
        _
    $region6: #{tpu_custom_call.1} parent=1 // loop_footer
      %s16 = sadd.s32 1, %s12
    $region7: #{tpu_custom_call.1} parent=1 // loop_footer_branch
      %11 = sbr.rel target = $region3
    $region8: #{tpu_custom_call.1} parent=1 // loop_exit
      _
    %2227 = vsyncpa [#allocation3], 1
    %s2228 = scalar_lea.sflag [#allocation3], 1
    %2229 = vsyncpa %s2228, 1

</llo_original>
